<compile_context>
chip_gen: v7x
topology: tpu7x:2x2x1
jax: 0.10.0
libtpu: 0.0.40
codegen_flags: <defaults>
</compile_context>

<pallas_src>
import jax
import jax.numpy as jnp
from jax.experimental import pallas as pl
from jax.experimental.pallas import tpu as pltpu


def _leaky_relu(x, slope=0.2):
    return jnp.where(x > 0, x, slope * x)


def mlp_disc_kernel(x_ref, w1_ref, b1_ref, w2_ref, b2_ref, w3_ref, b3_ref,
                    out_ref, acc_ref):
    """Grid = (batch tiles, K tiles). Layer-1 accumulates over K; layers 2/3
    + sigmoid run in the final K step."""
    k = pl.program_id(1)

    @pl.when(k == 0)
    def _():
        acc_ref[...] = jnp.zeros_like(acc_ref)

    # ---- layer 1 partial product: bf16 operands, f32 accumulation (MXU) ----
    acc_ref[...] += jnp.dot(
        x_ref[...].astype(jnp.bfloat16),          # (bm, tk) bf16
        w1_ref[...],                              # (tk, 512) bf16
        preferred_element_type=jnp.float32)

    @pl.when(k == pl.num_programs(1) - 1)
    def _():
        h1 = _leaky_relu(acc_ref[...] + b1_ref[...])              # (bm, 512) f32

        h2 = jnp.dot(h1.astype(jnp.bfloat16), w2_ref[...],        # (bm, 256) f32
                     preferred_element_type=jnp.float32) + b2_ref[...]
        h2 = _leaky_relu(h2)

        # final (256 -> 1) layer on the VPU: lane reduce instead of N=1 matmul
        h3 = jnp.sum(h2 * w3_ref[...], axis=-1, keepdims=True) + b3_ref[...]
        out_ref[...] = jax.nn.sigmoid(h3)                         # (bm, 1) f32


def linear_discriminator(img, params, *, tk=512):
    """img: (B, C, H, W) float32.  Returns validity (B, 1) float32."""
    B = img.shape[0]
    x = img.reshape(B, -1).astype(jnp.float32)                    # (B, dim)
    dim = x.shape[1]
    w1, b1, w2, b2, w3_row, b3 = params

    # Zero-pad the reduction dim to a multiple of tk (zeros add nothing to the
    # accumulation, so this is exact).
    k_pad = (-dim) % tk
    if k_pad:
        x = jnp.pad(x, ((0, 0), (0, k_pad)))
        w1 = jnp.pad(w1, ((0, k_pad), (0, 0)))
    kp = dim + k_pad

    # Batch tiling: shard rows across TensorCores only when B is large and
    # tile-friendly; otherwise a single batch block (e.g. B=2 here).
    if B >= 256 and B % 128 == 0:
        bm = 128
    else:
        bm = B
    grid = (pl.cdiv(B, bm), kp // tk)

    cost = pl.CostEstimate(
        flops=2 * B * (dim * 512 + 512 * 256 + 256),
        transcendentals=B,                         # sigmoid
        bytes_accessed=(x.size * 4 + w1.size * 2 + w2.size * 2
                        + (b1.size + b2.size + w3_row.size + b3.size) * 4
                        + B * 4),
    )

    out = pl.pallas_call(
        mlp_disc_kernel,
        out_shape=jax.ShapeDtypeStruct((B, 1), jnp.float32),
        grid_spec=pltpu.PrefetchScalarGridSpec(
            num_scalar_prefetch=0,
            grid=grid,
            in_specs=[
                pl.BlockSpec((bm, tk), lambda b, k: (b, k)),      # x tile
                pl.BlockSpec((tk, 512), lambda b, k: (k, 0)),     # w1 tile (streamed)
                pl.BlockSpec((1, 512), lambda b, k: (0, 0)),      # b1 (resident)
                pl.BlockSpec((512, 256), lambda b, k: (0, 0)),    # w2 (resident)
                pl.BlockSpec((1, 256), lambda b, k: (0, 0)),      # b2
                pl.BlockSpec((1, 256), lambda b, k: (0, 0)),      # w3 row
                pl.BlockSpec((1, 1), lambda b, k: (0, 0)),        # b3
            ],
            out_specs=pl.BlockSpec((bm, 1), lambda b, k: (b, 0)),
            scratch_shapes=[pltpu.VMEM((bm, 512), jnp.float32)],  # layer-1 acc
        ),
        compiler_params=pltpu.CompilerParams(
            dimension_semantics=("parallel", "arbitrary")),
        cost_estimate=cost,
    )(x, w1, b1, w2, b2, w3_row, b3)
    return out


def init_params(key, dim):
    """nn.Linear-style init U(-1/sqrt(in), 1/sqrt(in)).
    w1, w2 stored (in, out) in bf16; w3 stored as a (1, 256) f32 row;
    biases f32."""
    def linear(key, fan_in, fan_out):
        kw, kb = jax.random.split(key)
        bound = 1.0 / jnp.sqrt(fan_in)
        w = jax.random.uniform(kw, (fan_in, fan_out), jnp.float32, -bound, bound)
        b = jax.random.uniform(kb, (1, fan_out), jnp.float32, -bound, bound)
        return w, b

    k1, k2, k3 = jax.random.split(key, 3)
    w1, b1 = linear(k1, dim, 512)
    w2, b2 = linear(k2, 512, 256)
    w3, b3 = linear(k3, 256, 1)
    return (w1.astype(jnp.bfloat16), b1,
            w2.astype(jnp.bfloat16), b2,
            w3.T,                          # (1, 256) row, f32
            b3)                            # (1, 1) f32


def reference(img, params):
    """Pure-JAX reference with the same mixed precision (bf16 matmul operands,
    f32 accumulation / activations)."""
    B = img.shape[0]
    x = img.reshape(B, -1).astype(jnp.float32)
    w1, b1, w2, b2, w3_row, b3 = params
    h1 = _leaky_relu(jnp.dot(x.astype(jnp.bfloat16), w1,
                             preferred_element_type=jnp.float32) + b1)
    h2 = _leaky_relu(jnp.dot(h1.astype(jnp.bfloat16), w2,
                             preferred_element_type=jnp.float32) + b2)
    h3 = jnp.sum(h2 * w3_row, axis=-1, keepdims=True) + b3
    return jax.nn.sigmoid(h3)


if __name__ == "__main__":
    key = jax.random.PRNGKey(0)
    k_img, k_params = jax.random.split(key)

    B, C, H, W = 2, 4, 16, 16            # opt.dim = C*H*W = 1024
    dim = C * H * W

    img = jax.random.normal(k_img, (B, C, H, W), dtype=jnp.float32)
    params = init_params(k_params, dim)

    out = linear_discriminator(img, params)
    out = jax.block_until_ready(out)

    ref = reference(img, params)
    assert out.shape == (B, 1)
    assert jnp.allclose(out, ref, atol=1e-2, rtol=1e-2), (out, ref)

    print("KERNEL_OK")
</pallas_src>

<mosaic_0001>
module attributes {stable_mosaic.version = 11 : i64} {
  func.func @mlp_disc_kernel(%arg0: i32, %arg1: i32, %arg2: memref<2x512xf32, #tpu.memory_space<vmem>>, %arg3: memref<512x512xbf16, #tpu.memory_space<vmem>>, %arg4: memref<1x512xf32, #tpu.memory_space<vmem>>, %arg5: memref<512x256xbf16, #tpu.memory_space<vmem>>, %arg6: memref<1x256xf32, #tpu.memory_space<vmem>>, %arg7: memref<1x256xf32, #tpu.memory_space<vmem>>, %arg8: memref<1x1xf32, #tpu.memory_space<vmem>>, %arg9: memref<2x1xf32, #tpu.memory_space<vmem>>, %arg10: memref<2x512xf32, #tpu.memory_space<vmem>>) attributes {dimension_semantics = [#tpu.dimension_semantics<parallel>, #tpu.dimension_semantics<arbitrary>], iteration_bounds = array<i64: 1, 2>, scalar_prefetch = 0 : i64, scratch_operands = 1 : i64, tpu.core_type = #tpu.core_type<tc>, window_params = [{transform_indices = @transform_0, window_bounds = array<i64: 2, 512>}, {transform_indices = @transform_1, window_bounds = array<i64: 512, 512>}, {pipeline_mode = #tpu.pipeline_mode<synchronous>, transform_indices = @transform_2, window_bounds = array<i64: 1, 512>}, {pipeline_mode = #tpu.pipeline_mode<synchronous>, transform_indices = @transform_3, window_bounds = array<i64: 512, 256>}, {pipeline_mode = #tpu.pipeline_mode<synchronous>, transform_indices = @transform_4, window_bounds = array<i64: 1, 256>}, {pipeline_mode = #tpu.pipeline_mode<synchronous>, transform_indices = @transform_5, window_bounds = array<i64: 1, 256>}, {pipeline_mode = #tpu.pipeline_mode<synchronous>, transform_indices = @transform_6, window_bounds = array<i64: 1, 1>}, {transform_indices = @transform_7, window_bounds = array<i64: 2, 1>}]} {
    %c0_i32 = arith.constant 0 : i32
    %0 = arith.cmpi eq, %arg1, %c0_i32 : i32
    %1 = arith.extui %0 : i1 to i32
    %c0_i32_0 = arith.constant 0 : i32
    %2 = arith.cmpi ne, %1, %c0_i32_0 : i32
    scf.if %2 {
      %cst_9 = arith.constant 0.000000e+00 : f32
      %13 = vector.broadcast %cst_9 : f32 to vector<2x512xf32>
      %c0_10 = arith.constant 0 : index
      %c0_11 = arith.constant 0 : index
      %14 = vector.load %arg10[%c0_10, %c0_11] : memref<2x512xf32, #tpu.memory_space<vmem>>, vector<2x512xf32>
      tpu.vector_store %arg10[%c0_10, %c0_11], %13 {strides = array<i32>} : memref<2x512xf32, #tpu.memory_space<vmem>>, vector<2x512xf32>,
    } else {
    }
    %c0 = arith.constant 0 : index
    %c0_1 = arith.constant 0 : index
    %3 = vector.load %arg10[%c0, %c0_1] : memref<2x512xf32, #tpu.memory_space<vmem>>, vector<2x512xf32>
    %c0_2 = arith.constant 0 : index
    %c0_3 = arith.constant 0 : index
    %4 = vector.load %arg2[%c0_2, %c0_3] : memref<2x512xf32, #tpu.memory_space<vmem>>, vector<2x512xf32>
    %5 = arith.truncf %4 : vector<2x512xf32> to vector<2x512xbf16>
    %c0_4 = arith.constant 0 : index
    %c0_5 = arith.constant 0 : index
    %6 = vector.load %arg3[%c0_4, %c0_5] : memref<512x512xbf16, #tpu.memory_space<vmem>>, vector<512x512xbf16>
    %cst = arith.constant dense<0.000000e+00> : vector<2x512xf32>
    %7 = tpu.matmul %5, %6, %cst {dimension_numbers = #tpu.dot_dimension_numbers<[1], [0], [0], [1], [0, 0, 1, 1], [], []>} : vector<2x512xbf16>, vector<512x512xbf16>, vector<2x512xf32> -> vector<2x512xf32>
    %8 = arith.addf %3, %7 : vector<2x512xf32>
    %c0_6 = arith.constant 0 : index
    %c0_7 = arith.constant 0 : index
    %9 = vector.load %arg10[%c0_6, %c0_7] : memref<2x512xf32, #tpu.memory_space<vmem>>, vector<2x512xf32>
    tpu.vector_store %arg10[%c0_6, %c0_7], %8 {strides = array<i32>} : memref<2x512xf32, #tpu.memory_space<vmem>>, vector<2x512xf32>,
    %c1_i32 = arith.constant 1 : i32
    %10 = arith.cmpi eq, %arg1, %c1_i32 : i32
    %11 = arith.extui %10 : i1 to i32
    %c0_i32_8 = arith.constant 0 : i32
    %12 = arith.cmpi ne, %11, %c0_i32_8 : i32
    scf.if %12 {
      %c0_9 = arith.constant 0 : index
      %c0_10 = arith.constant 0 : index
      %13 = vector.load %arg10[%c0_9, %c0_10] : memref<2x512xf32, #tpu.memory_space<vmem>>, vector<2x512xf32>
      %c0_11 = arith.constant 0 : index
      %c0_12 = arith.constant 0 : index
      %14 = vector.load %arg4[%c0_11, %c0_12] : memref<1x512xf32, #tpu.memory_space<vmem>>, vector<1x512xf32>
      %15 = vector.broadcast %14 : vector<1x512xf32> to vector<2x512xf32>
      %16 = arith.addf %13, %15 : vector<2x512xf32>
      %cst_13 = arith.constant 0.000000e+00 : f32
      %17 = vector.broadcast %cst_13 : f32 to vector<2x512xf32>
      %18 = arith.cmpf ogt, %16, %17 : vector<2x512xf32>
      %cst_14 = arith.constant 2.000000e-01 : f32
      %19 = vector.broadcast %cst_14 : f32 to vector<2x512xf32>
      %20 = arith.mulf %19, %16 : vector<2x512xf32>
      %21 = arith.select %18, %16, %20 : vector<2x512xi1>, vector<2x512xf32>
      %22 = arith.truncf %21 : vector<2x512xf32> to vector<2x512xbf16>
      %c0_15 = arith.constant 0 : index
      %c0_16 = arith.constant 0 : index
      %23 = vector.load %arg5[%c0_15, %c0_16] : memref<512x256xbf16, #tpu.memory_space<vmem>>, vector<512x256xbf16>
      %cst_17 = arith.constant dense<0.000000e+00> : vector<2x256xf32>
      %24 = tpu.matmul %22, %23, %cst_17 {dimension_numbers = #tpu.dot_dimension_numbers<[1], [0], [0], [1], [0, 0, 1, 1], [], []>} : vector<2x512xbf16>, vector<512x256xbf16>, vector<2x256xf32> -> vector<2x256xf32>
      %c0_18 = arith.constant 0 : index
      %c0_19 = arith.constant 0 : index
      %25 = vector.load %arg6[%c0_18, %c0_19] : memref<1x256xf32, #tpu.memory_space<vmem>>, vector<1x256xf32>
      %26 = vector.broadcast %25 : vector<1x256xf32> to vector<2x256xf32>
      %27 = arith.addf %24, %26 : vector<2x256xf32>
      %cst_20 = arith.constant 0.000000e+00 : f32
      %28 = vector.broadcast %cst_20 : f32 to vector<2x256xf32>
      %29 = arith.cmpf ogt, %27, %28 : vector<2x256xf32>
      %cst_21 = arith.constant 2.000000e-01 : f32
      %30 = vector.broadcast %cst_21 : f32 to vector<2x256xf32>
      %31 = arith.mulf %30, %27 : vector<2x256xf32>
      %32 = arith.select %29, %27, %31 : vector<2x256xi1>, vector<2x256xf32>
      %c0_22 = arith.constant 0 : index
      %c0_23 = arith.constant 0 : index
      %33 = vector.load %arg7[%c0_22, %c0_23] : memref<1x256xf32, #tpu.memory_space<vmem>>, vector<1x256xf32>
      %34 = vector.broadcast %33 : vector<1x256xf32> to vector<2x256xf32>
      %35 = arith.mulf %32, %34 : vector<2x256xf32>
      %cst_24 = arith.constant dense<0.000000e+00> : vector<2xf32>
      %36 = vector.multi_reduction <add>, %35, %cst_24 [1] : vector<2x256xf32> to vector<2xf32>
      %37 = vector.shape_cast %36 : vector<2xf32> to vector<2x1xf32>
      %c0_25 = arith.constant 0 : index
      %c0_26 = arith.constant 0 : index
      %38 = vector.load %arg8[%c0_25, %c0_26] : memref<1x1xf32, #tpu.memory_space<vmem>>, vector<1x1xf32>
      %39 = vector.broadcast %38 : vector<1x1xf32> to vector<2x1xf32>
      %40 = arith.addf %37, %39 : vector<2x1xf32>
      %41 = arith.negf %40 : vector<2x1xf32>
      %42 = math.exp %41 : vector<2x1xf32>
      %cst_27 = arith.constant 1.000000e+00 : f32
      %43 = vector.broadcast %cst_27 : f32 to vector<2x1xf32>
      %44 = arith.addf %43, %42 : vector<2x1xf32>
      %45 = arith.divf %43, %44 : vector<2x1xf32>
      %c0_28 = arith.constant 0 : index
      %c0_29 = arith.constant 0 : index
      %46 = vector.load %arg9[%c0_28, %c0_29] : memref<2x1xf32, #tpu.memory_space<vmem>>, vector<2x1xf32>
      tpu.vector_store %arg9[%c0_28, %c0_29], %45 {strides = array<i32>} : memref<2x1xf32, #tpu.memory_space<vmem>>, vector<2x1xf32>,
    } else {
    }
    return
  }
  func.func @transform_0(%arg0: i32, %arg1: i32) -> (i32, i32) {
    %c0_i32 = arith.constant 0 : i32
    return %arg0, %arg1 : i32, i32
  }
  func.func @transform_1(%arg0: i32, %arg1: i32) -> (i32, i32) {
    %c0_i32 = arith.constant 0 : i32
    %c0_i32_0 = arith.constant 0 : i32
    return %arg1, %c0_i32 : i32, i32
  }
  func.func @transform_2(%arg0: i32, %arg1: i32) -> (i32, i32) {
    %c0_i32 = arith.constant 0 : i32
    %c0_i32_0 = arith.constant 0 : i32
    %c0_i32_1 = arith.constant 0 : i32
    return %c0_i32, %c0_i32_0 : i32, i32
  }
  func.func @transform_3(%arg0: i32, %arg1: i32) -> (i32, i32) {
    %c0_i32 = arith.constant 0 : i32
    %c0_i32_0 = arith.constant 0 : i32
    %c0_i32_1 = arith.constant 0 : i32
    return %c0_i32, %c0_i32_0 : i32, i32
  }
  func.func @transform_4(%arg0: i32, %arg1: i32) -> (i32, i32) {
    %c0_i32 = arith.constant 0 : i32
    %c0_i32_0 = arith.constant 0 : i32
    %c0_i32_1 = arith.constant 0 : i32
    return %c0_i32, %c0_i32_0 : i32, i32
  }
  func.func @transform_5(%arg0: i32, %arg1: i32) -> (i32, i32) {
    %c0_i32 = arith.constant 0 : i32
    %c0_i32_0 = arith.constant 0 : i32
    %c0_i32_1 = arith.constant 0 : i32
    return %c0_i32, %c0_i32_0 : i32, i32
  }
  func.func @transform_6(%arg0: i32, %arg1: i32) -> (i32, i32) {
    %c0_i32 = arith.constant 0 : i32
    %c0_i32_0 = arith.constant 0 : i32
    %c0_i32_1 = arith.constant 0 : i32
    return %c0_i32, %c0_i32_0 : i32, i32
  }
  func.func @transform_7(%arg0: i32, %arg1: i32) -> (i32, i32) {
    %c0_i32 = arith.constant 0 : i32
    %c0_i32_0 = arith.constant 0 : i32
    return %arg0, %c0_i32 : i32, i32
  }
}

</mosaic_0001>

<llo_original>
// kernel: tpu_custom_call.1
$region0: #{tpu_custom_call.1}
  #allocation0 [shape = 'u32[]', space=smem, size = 0x4, offset = 0x4, fixed_abs, tag = 'smem constant byte address 0x4 - core index']
  #allocation1 [shape = 'u32[144,128]{1,0:T(1,128)}', space=vmem, size = 0x12000, scoped, tag = 'internal scratch']
  #allocation2 [shape = 'f32[2,512]{1,0:T(2,128)}', space=vmem, size = 0x1000, scoped, tag = 'scratch operand']
  #allocation3 [shape = 'f32[1,1]{1,0:T(1,128)S(1)}', space=vmem, size = 0x200, scoped, tag = 'scoped memory for tpu_custom_call.1']
  %s0 = inlined_call_operand.hbm [shape: f32[2,1024], index: 0, kind: input, shape index: {}]
  %s1 = inlined_call_operand.hbm [shape: bf16[1024,512], index: 1, kind: input, shape index: {}]
  %s2 = inlined_call_operand.vmem [shape: f32[1,512], index: 2, kind: input, shape index: {}]
  %s3 = inlined_call_operand.hbm [shape: bf16[512,256], index: 3, kind: input, shape index: {}]
  %s4 = inlined_call_operand.vmem [shape: f32[1,256], index: 4, kind: input, shape index: {}]
  %s5 = inlined_call_operand.vmem [shape: f32[1,256], index: 5, kind: input, shape index: {}]
  %s6 = inlined_call_operand.<no memory space> [shape: f32[1,1], index: 6, kind: input, shape index: {}]
  %s7 = inlined_call_operand.vmem [shape: f32[2,1], index: 7, kind: output, shape index: {}]
  %s8 = sld [smem:[#allocation0]]
  $region81: #{tpu_custom_call.1} parent=0
    _
  %s10 = ssub.s32 1, %s8
  %s11 = scalar_select 0, %s10, %s8
  %v12 = vstv %s6
  %13 = vst [vmem:[#allocation3] sm:$0x1] %v12
  $region1: #{tpu_custom_call.1} parent=0
    #allocation4 [shape = 'u8[8192]{0}', space=vmem, size = 0x2000, scoped, tag = 'input window, operand 0']
    #allocation5 [shape = 's32[2]{0}', space=sflag, size = 0x8, scoped, tag = 'scoped memory for tpu_custom_call.1']
    #allocation6 [shape = 'u8[1048576]{0}', space=vmem, size = 0x100000, scoped, tag = 'input window, operand 1']
    #allocation7 [shape = 's32[2]{0}', space=sflag, size = 0x8, scoped, tag = 'scoped memory for tpu_custom_call.1']
    #allocation8 [shape = 'u8[262144]{0}', space=vmem, size = 0x40000, scoped, tag = 'input window, operand 3, single buffered']
    %14 = vsyncpa [#allocation5], 0
    %s15 = scalar_lea.sflag [#allocation5], 1
    %16 = vsyncpa %s15, 0
    %17 = vsyncpa [#allocation7], 0
    %s18 = scalar_lea.sflag [#allocation7], 1
    %19 = vsyncpa %s18, 0
    loop: start=0, step=1, limit=4
    $region2: #{tpu_custom_call.1} parent=1 // loop_pre_header
      _
    $region3: #{tpu_custom_call.1} parent=1 // loop_header
      %s21 = sphi 0, %s25
      %p22 = scmp.ge.s32.totalorder %s21, 4
      %s28 = sphi 0, %s40
      %s29 = sphi 0, %s36
      %s30 = sphi 0, %s28
      %s31 = sphi 0, %s29
      %s32 = sphi 0, %s30
      %s33 = sphi 0, %s31
      %s45 = sphi 0, %s47
      %s48 = sphi 0, %s45
      %s49 = sphi 0, %s48
      %s65 = sphi 0, %s49
      %s71 = sphi 0, %s73
      %s74 = sphi 0, %s71
      %s75 = sphi 0, %s74
      %s91 = sphi 0, %s75
      %s95 = sphi 0, %s95
      %s97 = sphi 0, %s95
      %s98 = sphi 0, %s97
      %s112 = sphi 0, %s98
      %s116 = sphi 0, %s116
      %s118 = sphi 0, %s116
      %s119 = sphi 0, %s118
      %s133 = sphi 0, %s119
      %s137 = sphi 0, %s137
      %s139 = sphi 0, %s137
      %s140 = sphi 0, %s139
      %s154 = sphi 0, %s140
      %s158 = sphi 0, %s158
      %s160 = sphi 0, %s158
      %s161 = sphi 0, %s160
      %s175 = sphi 0, %s161
      %s179 = sphi 0, %s179
      %s181 = sphi 0, %s179
      %s182 = sphi 0, %s181
      %s196 = sphi 0, %s182
      %s202 = sphi 0, %s204
      %s205 = sphi 0, %s202
      %s206 = sphi 0, %s205
      %s222 = sphi 0, %s206
    $region4: #{tpu_custom_call.1} parent=1 // loop_header_branch
      %24 = sbr.rel (%p22) target = $region8
    $region5: #{tpu_custom_call.1} parent=1 // loop_body
      %s26 = ssub.s32 %s21, 1
      %s27 = ssub.s32 %s21, 2
      %s34 = sadd.s32 1, %s29
      %p35 = scmp.ge.s32.totalorder %s34, 2
      %s36 = scalar_select %p35, 0, %s34
      %s37 = sadd.s32 1, %s28
      %s38 = scalar_select %p35, %s37, %s28
      %p39 = scmp.ge.s32.totalorder %s38, 1
      %s40 = scalar_select %p39, 0, %s38
      %s41 = ssub.s32 %s28, %s40
      %s42 = ssub.s32 %s29, %s36
      %s43 = sor.u32 %s41, %s42
      %p44 = scmp.eq.s32.totalorder %s43, 0
      %s46 = sadd.s32 %s45, 1
      %s47 = scalar_select %p44, %s45, %s46
      %p50 = pneg %p44
      %p51 = scmp.eq.s32.totalorder %s21, 1
      %p52 = por %p50, %p51
      %p53 = scmp.ne.s32.totalorder %s45, %s48
      %p54 = scmp.eq.s32.totalorder %s21, 0
      %p55 = por %p53, %p54
      %p56 = scmp.ne.s32.totalorder %s45, %s48
      %p57 = scmp.eq.s32.totalorder %s26, 1
      %p58 = por %p56, %p57
      %p59 = scmp.ne.s32.totalorder %s48, %s49
      %p60 = scmp.eq.s32.totalorder %s26, 0
      %p61 = por %p59, %p60
      %p62 = scmp.ne.s32.totalorder %s48, %s49
      %p63 = scmp.eq.s32.totalorder %s27, 1
      %p64 = por %p62, %p63
      %p66 = scmp.ne.s32.totalorder %s49, %s65
      %p67 = scmp.eq.s32.totalorder %s27, 0
      %p68 = por %p66, %p67
      %s69 = ssub.s32 %s29, %s36
      %p70 = scmp.eq.s32.totalorder %s69, 0
      %s72 = sadd.s32 %s71, 1
      %s73 = scalar_select %p70, %s71, %s72
      %p76 = pneg %p70
      %p77 = scmp.eq.s32.totalorder %s21, 1
      %p78 = por %p76, %p77
      %p79 = scmp.ne.s32.totalorder %s71, %s74
      %p80 = scmp.eq.s32.totalorder %s21, 0
      %p81 = por %p79, %p80
      %p82 = scmp.ne.s32.totalorder %s71, %s74
      %p83 = scmp.eq.s32.totalorder %s26, 1
      %p84 = por %p82, %p83
      %p85 = scmp.ne.s32.totalorder %s74, %s75
      %p86 = scmp.eq.s32.totalorder %s26, 0
      %p87 = por %p85, %p86
      %p88 = scmp.ne.s32.totalorder %s74, %s75
      %p89 = scmp.eq.s32.totalorder %s27, 1
      %p90 = por %p88, %p89
      %p92 = scmp.ne.s32.totalorder %s75, %s91
      %p93 = scmp.eq.s32.totalorder %s27, 0
      %p94 = por %p92, %p93
      %s96 = sadd.s32 %s95, 1
      %p99 = scmp.eq.s32.totalorder %s21, 1
      %p100 = scmp.ne.s32.totalorder %s95, %s97
      %p101 = scmp.eq.s32.totalorder %s21, 0
      %p102 = por %p100, %p101
      %p103 = scmp.ne.s32.totalorder %s95, %s97
      %p104 = scmp.eq.s32.totalorder %s26, 1
      %p105 = por %p103, %p104
      %p106 = scmp.ne.s32.totalorder %s97, %s98
      %p107 = scmp.eq.s32.totalorder %s26, 0
      %p108 = por %p106, %p107
      %p109 = scmp.ne.s32.totalorder %s97, %s98
      %p110 = scmp.eq.s32.totalorder %s27, 1
      %p111 = por %p109, %p110
      %p113 = scmp.ne.s32.totalorder %s98, %s112
      %p114 = scmp.eq.s32.totalorder %s27, 0
      %p115 = por %p113, %p114
      %s117 = sadd.s32 %s116, 1
      %p120 = scmp.eq.s32.totalorder %s21, 1
      %p121 = scmp.ne.s32.totalorder %s116, %s118
      %p122 = scmp.eq.s32.totalorder %s21, 0
      %p123 = por %p121, %p122
      %p124 = scmp.ne.s32.totalorder %s116, %s118
      %p125 = scmp.eq.s32.totalorder %s26, 1
      %p126 = por %p124, %p125
      %p127 = scmp.ne.s32.totalorder %s118, %s119
      %p128 = scmp.eq.s32.totalorder %s26, 0
      %p129 = por %p127, %p128
      %p130 = scmp.ne.s32.totalorder %s118, %s119
      %p131 = scmp.eq.s32.totalorder %s27, 1
      %p132 = por %p130, %p131
      %p134 = scmp.ne.s32.totalorder %s119, %s133
      %p135 = scmp.eq.s32.totalorder %s27, 0
      %p136 = por %p134, %p135
      %s138 = sadd.s32 %s137, 1
      %p141 = scmp.eq.s32.totalorder %s21, 1
      %p142 = scmp.ne.s32.totalorder %s137, %s139
      %p143 = scmp.eq.s32.totalorder %s21, 0
      %p144 = por %p142, %p143
      %p145 = scmp.ne.s32.totalorder %s137, %s139
      %p146 = scmp.eq.s32.totalorder %s26, 1
      %p147 = por %p145, %p146
      %p148 = scmp.ne.s32.totalorder %s139, %s140
      %p149 = scmp.eq.s32.totalorder %s26, 0
      %p150 = por %p148, %p149
      %p151 = scmp.ne.s32.totalorder %s139, %s140
      %p152 = scmp.eq.s32.totalorder %s27, 1
      %p153 = por %p151, %p152
      %p155 = scmp.ne.s32.totalorder %s140, %s154
      %p156 = scmp.eq.s32.totalorder %s27, 0
      %p157 = por %p155, %p156
      %s159 = sadd.s32 %s158, 1
      %p162 = scmp.eq.s32.totalorder %s21, 1
      %p163 = scmp.ne.s32.totalorder %s158, %s160
      %p164 = scmp.eq.s32.totalorder %s21, 0
      %p165 = por %p163, %p164
      %p166 = scmp.ne.s32.totalorder %s158, %s160
      %p167 = scmp.eq.s32.totalorder %s26, 1
      %p168 = por %p166, %p167
      %p169 = scmp.ne.s32.totalorder %s160, %s161
      %p170 = scmp.eq.s32.totalorder %s26, 0
      %p171 = por %p169, %p170
      %p172 = scmp.ne.s32.totalorder %s160, %s161
      %p173 = scmp.eq.s32.totalorder %s27, 1
      %p174 = por %p172, %p173
      %p176 = scmp.ne.s32.totalorder %s161, %s175
      %p177 = scmp.eq.s32.totalorder %s27, 0
      %p178 = por %p176, %p177
      %s180 = sadd.s32 %s179, 1
      %p183 = scmp.eq.s32.totalorder %s21, 1
      %p184 = scmp.ne.s32.totalorder %s179, %s181
      %p185 = scmp.eq.s32.totalorder %s21, 0
      %p186 = por %p184, %p185
      %p187 = scmp.ne.s32.totalorder %s179, %s181
      %p188 = scmp.eq.s32.totalorder %s26, 1
      %p189 = por %p187, %p188
      %p190 = scmp.ne.s32.totalorder %s181, %s182
      %p191 = scmp.eq.s32.totalorder %s26, 0
      %p192 = por %p190, %p191
      %p193 = scmp.ne.s32.totalorder %s181, %s182
      %p194 = scmp.eq.s32.totalorder %s27, 1
      %p195 = por %p193, %p194
      %p197 = scmp.ne.s32.totalorder %s182, %s196
      %p198 = scmp.eq.s32.totalorder %s27, 0
      %p199 = por %p197, %p198
      %s200 = ssub.s32 %s28, %s40
      %p201 = scmp.eq.s32.totalorder %s200, 0
      %s203 = sadd.s32 %s202, 1
      %s204 = scalar_select %p201, %s202, %s203
      %p207 = pneg %p201
      %p208 = scmp.eq.s32.totalorder %s21, 1
      %p209 = por %p207, %p208
      %p210 = scmp.ne.s32.totalorder %s202, %s205
      %p211 = scmp.eq.s32.totalorder %s21, 0
      %p212 = por %p210, %p211
      %p213 = scmp.ne.s32.totalorder %s202, %s205
      %p214 = scmp.eq.s32.totalorder %s26, 1
      %p215 = por %p213, %p214
      %p216 = scmp.ne.s32.totalorder %s205, %s206
      %p217 = scmp.eq.s32.totalorder %s26, 0
      %p218 = por %p216, %p217
      %p219 = scmp.ne.s32.totalorder %s205, %s206
      %p220 = scmp.eq.s32.totalorder %s27, 1
      %p221 = por %p219, %p220
      %p223 = scmp.ne.s32.totalorder %s206, %s222
      %p224 = scmp.eq.s32.totalorder %s27, 0
      %p225 = por %p223, %p224
      %p226 = scmp.le.s32.totalorder 1, %s21
      %p227 = scmp.lt.s32.totalorder %s21, 3
      %p228 = pnand %p226, %p227
      %p229 = pneg %p228
      // Predicated region
      $region9: #{tpu_custom_call.1} parent=5 // pred_check
        _
      $region10: #{tpu_custom_call.1} parent=5 // pred_check_branch
        %231 = sbr.rel (%p228) target = $region12
      $region11: #{tpu_custom_call.1} parent=5 // pred_region
        %s232 = ssub.s32 %s21, 1
        // Predicated region
        $region13: #{tpu_custom_call.1} parent=11 // pred_check
          %p233 = pneg %p108
        $region14: #{tpu_custom_call.1} parent=11 // pred_check_branch
          %235 = sbr.rel (%p233) target = $region16
        $region15: #{tpu_custom_call.1} parent=11 // pred_region
          _
        $region16: #{tpu_custom_call.1} parent=11 // pred_fallthru
          _
        // Predicated region
        $region17: #{tpu_custom_call.1} parent=11 // pred_check
          %p236 = pneg %p129
        $region18: #{tpu_custom_call.1} parent=11 // pred_check_branch
          %238 = sbr.rel (%p236) target = $region20
        $region19: #{tpu_custom_call.1} parent=11 // pred_region
          %s240 = ssub.s32 8192, 8192
          %241 = vsyncadd [#allocation7], %s240
          %s242 = sshll.u32 [#allocation8], 4
          %s243 = int_to_ptr.vmem [resolvable:$true] %s242
          %248 = dma.hbm_to_vmem [thread:$0]  %s3, 8192, %s243, [#allocation7], 128, 128, 8
        $region20: #{tpu_custom_call.1} parent=11 // pred_fallthru
          _
        // Predicated region
        $region21: #{tpu_custom_call.1} parent=11 // pred_check
          %p249 = pneg %p150
        $region22: #{tpu_custom_call.1} parent=11 // pred_check_branch
          %251 = sbr.rel (%p249) target = $region24
        $region23: #{tpu_custom_call.1} parent=11 // pred_region
          _
        $region24: #{tpu_custom_call.1} parent=11 // pred_fallthru
          _
        // Predicated region
        $region25: #{tpu_custom_call.1} parent=11 // pred_check
          %p252 = pneg %p171
        $region26: #{tpu_custom_call.1} parent=11 // pred_check_branch
          %254 = sbr.rel (%p252) target = $region28
        $region27: #{tpu_custom_call.1} parent=11 // pred_region
          _
        $region28: #{tpu_custom_call.1} parent=11 // pred_fallthru
          _
        // Predicated region
        $region29: #{tpu_custom_call.1} parent=11 // pred_check
          %p255 = pneg %p192
        $region30: #{tpu_custom_call.1} parent=11 // pred_check_branch
          %257 = sbr.rel (%p255) target = $region32
        $region31: #{tpu_custom_call.1} parent=11 // pred_region
          _
        $region32: #{tpu_custom_call.1} parent=11 // pred_fallthru
          _
      $region12: #{tpu_custom_call.1} parent=5 // pred_fallthru
        _
      %p258 = scmp.lt.s32.totalorder %s21, 2
      // Predicated region
      $region33: #{tpu_custom_call.1} parent=5 // pred_check
        %p259 = pneg %p258
      $region34: #{tpu_custom_call.1} parent=5 // pred_check_branch
        %261 = sbr.rel (%p259) target = $region36
      $region35: #{tpu_custom_call.1} parent=5 // pred_region
        // Predicated region
        $region37: #{tpu_custom_call.1} parent=35 // pred_check
          %p262 = pneg %p55
        $region38: #{tpu_custom_call.1} parent=35 // pred_check_branch
          %264 = sbr.rel (%p262) target = $region40
        $region39: #{tpu_custom_call.1} parent=35 // pred_region
          %s265 = sand.u32 %s45, 1
          %s266 = scalar_lea.sflag [#allocation5], %s265
          %s267 = sand.u32 %s45, 1
          %s268 = smul.addr %s267, 8
          %s269 = scalar_lea.vmem [#allocation4], %s268
          %s270 = smul.u32 4, %s29
          %s272 = ssub.s32 128, 128
          %273 = vsyncadd %s266, %s272
          %s274 = smul.addr %s28, 8
          %s275 = sadd.s32 %s270, %s274
          %s276 = smul.addr %s275, 32
          %s277 = scalar_lea.hbm %s0, %s276
          %s279 = sshll.u32 %s269, 4
          %s280 = int_to_ptr.vmem [resolvable:$true] %s279
          %282 = dma.hbm_to_vmem [thread:$0]  %s277, 128, %s280, %s266
        $region40: #{tpu_custom_call.1} parent=35 // pred_fallthru
          _
        // Predicated region
        $region41: #{tpu_custom_call.1} parent=35 // pred_check
          %p283 = pneg %p81
        $region42: #{tpu_custom_call.1} parent=35 // pred_check_branch
          %285 = sbr.rel (%p283) target = $region44
        $region43: #{tpu_custom_call.1} parent=35 // pred_region
          %s286 = sand.u32 %s21, 1
          %s287 = scalar_lea.sflag [#allocation7], %s286
          %s288 = sand.u32 %s71, 1
          %s289 = smul.addr %s288, 1024
          %s290 = scalar_lea.vmem [#allocation6], %s289
          %s291 = smul.u32 64, %s29
          %s293 = ssub.s32 16384, 16384
          %294 = vsyncadd %s287, %s293
          %s295 = smul.addr %s291, 4
          %s296 = smul.addr %s295, 64
          %s297 = scalar_lea.hbm %s1, %s296
          %s298 = sshll.u32 %s290, 4
          %s299 = int_to_ptr.vmem [resolvable:$true] %s298
          %304 = dma.hbm_to_vmem [thread:$0]  %s297, 16384, %s299, %s287, 256, 256, 16
        $region44: #{tpu_custom_call.1} parent=35 // pred_fallthru
          _
      $region36: #{tpu_custom_call.1} parent=5 // pred_fallthru
        _
      %p305 = scmp.le.s32.totalorder 1, %s21
      %p306 = scmp.lt.s32.totalorder %s21, 3
      %p307 = pnand %p305, %p306
      %p308 = pneg %p307
      // Predicated region
      $region45: #{tpu_custom_call.1} parent=5 // pred_check
        _
      $region46: #{tpu_custom_call.1} parent=5 // pred_check_branch
        %310 = sbr.rel (%p307) target = $region48
      $region47: #{tpu_custom_call.1} parent=5 // pred_region
        %s311 = ssub.s32 %s21, 1
        %s312 = sand.u32 %s48, 1
        %s313 = scalar_lea.sflag [#allocation5], %s312
        %s314 = sand.u32 %s48, 1
        %s315 = smul.addr %s314, 8
        %s316 = scalar_lea.vmem [#allocation4], %s315
        // Predicated region
        $region49: #{tpu_custom_call.1} parent=47 // pred_check
          %p317 = pneg %p61
        $region50: #{tpu_custom_call.1} parent=47 // pred_check_branch
          %319 = sbr.rel (%p317) target = $region52
        $region51: #{tpu_custom_call.1} parent=47 // pred_region
          %320 = dma.done %s313, 128
        $region52: #{tpu_custom_call.1} parent=47 // pred_fallthru
          _
        %s321 = sand.u32 %s26, 1
        %s322 = scalar_lea.sflag [#allocation7], %s321
        %s323 = sand.u32 %s74, 1
        %s324 = smul.addr %s323, 1024
        %s325 = scalar_lea.vmem [#allocation6], %s324
        // Predicated region
        $region53: #{tpu_custom_call.1} parent=47 // pred_check
          %p326 = pneg %p87
        $region54: #{tpu_custom_call.1} parent=47 // pred_check_branch
          %328 = sbr.rel (%p326) target = $region56
        $region55: #{tpu_custom_call.1} parent=47 // pred_region
          %329 = dma.done %s322, 16384
        $region56: #{tpu_custom_call.1} parent=47 // pred_fallthru
          _
        // Predicated region
        $region57: #{tpu_custom_call.1} parent=47 // pred_check
          %p330 = pneg %p129
        $region58: #{tpu_custom_call.1} parent=47 // pred_check_branch
          %332 = sbr.rel (%p330) target = $region60
        $region59: #{tpu_custom_call.1} parent=47 // pred_region
          %333 = dma.done [#allocation7], 8192
        $region60: #{tpu_custom_call.1} parent=47 // pred_fallthru
          _
        %s334 = sand.u32 %s48, 1
        %s335 = scalar_lea.sflag [#allocation5], %s334
        %s336 = sand.u32 %s48, 1
        %s337 = smul.addr %s336, 8
        %s338 = scalar_lea.vmem [#allocation4], %s337
        %p339 = pneg %p61
        %p340 = pneg %p58
        %s341 = sand.u32 %s26, 1
        %s342 = scalar_lea.sflag [#allocation7], %s341
        %s343 = sand.u32 %s74, 1
        %s344 = smul.addr %s343, 1024
        %s345 = scalar_lea.vmem [#allocation6], %s344
        %p346 = pneg %p87
        %p347 = pneg %p84
        %p348 = pneg %p108
        %p349 = pneg %p105
        %p350 = pneg %p129
        %p351 = pneg %p126
        %p352 = pneg %p150
        %p353 = pneg %p147
        %p354 = pneg %p171
        %p355 = pneg %p168
        %p356 = pneg %p192
        %p357 = pneg %p189
        %p358 = pneg %p218
        %p359 = pneg %p215
        %p360 = scmp.lt.s32.totalorder %s30, 0
        %s361 = scalar_select %p360, %s30, 0
        %s362 = smul.addr %s361, 2
        %s363 = scalar_lea.vmem %s7, %s362
        %s364 = smul.u32 4, %s31
        %s365 = smul.u32 64, %s31
        %p366 = scmp.lt.s32.totalorder %s30, 0
        %s367 = scalar_select %p366, %s30, 0
        %s368 = smul.addr %s367, 2
        %s369 = scalar_lea.vmem %s7, %s368
        %p370 = scmp.eq.s32.totalorder %s31, 0
        // Predicated region
        $region61: #{tpu_custom_call.1} parent=47 // pred_check
          %p371 = pneg %p370
        $region62: #{tpu_custom_call.1} parent=47 // pred_check_branch
          %373 = sbr.rel (%p371) target = $region64
        $region63: #{tpu_custom_call.1} parent=47 // pred_region
          %374 = vst [vmem:[#allocation2] sm:$0xff] 0.0
        $region64: #{tpu_custom_call.1} parent=47 // pred_fallthru
          _
        %v375 = vld [vmem:[#allocation2] sm:$0xff]
        %v376 = vld [vmem:[%s316] sm:$0xff]
        %v378 = vcombine.high %v376, %v376
        %v380 = vunpack.c.l.s4 1983009808
        %v381 = vunpack.c.0.s8 %v380
        %v382 = vlaneseq
        %v383 = vshrl.u32 %v382, 7
        %v384 = vsub.s32 %v381, %v383
        %v385 = vrot.slane %v376, %v384
        %v387 = vunpack.c.l.s4 1983009808
        %v388 = vunpack.c.0.s8 %v387
        %v389 = vlaneseq
        %v390 = vshrl.u32 %v389, 7
        %v391 = vsub.s32 %v388, %v390
        %v392 = vrot.slane %v378, %v391
        %v393 = vcombine.high %v385, %v385
        %v394 = vcombine.high %v392, %v392
        %v399 = vpack.c.bf16 %v385, %v385
        %v400 = vpack.c.bf16 %v393, %v393
        %v401 = vpack.c.bf16 %v392, %v392
        %v402 = vpack.c.bf16 %v394, %v394
        %v403 = vld [vmem:[%s325] sm:$0xff]
        %v404 = vld [vmem:[%s325 + $0x8] sm:$0xff]
        %v405 = vld [vmem:[%s325 + $0x10] sm:$0xff]
        %v406 = vld [vmem:[%s325 + $0x18] sm:$0xff]
        %v407 = vld [vmem:[%s325 + $0x20] sm:$0xff]
        %v408 = vld [vmem:[%s325 + $0x28] sm:$0xff]
        %v409 = vld [vmem:[%s325 + $0x30] sm:$0xff]
        %v410 = vld [vmem:[%s325 + $0x38] sm:$0xff]
        %v411 = vld [vmem:[%s325 + $0x40] sm:$0xff]
        %v412 = vld [vmem:[%s325 + $0x48] sm:$0xff]
        %v413 = vld [vmem:[%s325 + $0x50] sm:$0xff]
        %v414 = vld [vmem:[%s325 + $0x58] sm:$0xff]
        %v415 = vld [vmem:[%s325 + $0x60] sm:$0xff]
        %v416 = vld [vmem:[%s325 + $0x68] sm:$0xff]
        %v417 = vld [vmem:[%s325 + $0x70] sm:$0xff]
        %v418 = vld [vmem:[%s325 + $0x78] sm:$0xff]
        %v419 = vld [vmem:[%s325 + $0x80] sm:$0xff]
        %v420 = vld [vmem:[%s325 + $0x88] sm:$0xff]
        %v421 = vld [vmem:[%s325 + $0x90] sm:$0xff]
        %v422 = vld [vmem:[%s325 + $0x98] sm:$0xff]
        %v423 = vld [vmem:[%s325 + $0xa0] sm:$0xff]
        %v424 = vld [vmem:[%s325 + $0xa8] sm:$0xff]
        %v425 = vld [vmem:[%s325 + $0xb0] sm:$0xff]
        %v426 = vld [vmem:[%s325 + $0xb8] sm:$0xff]
        %v427 = vld [vmem:[%s325 + $0xc0] sm:$0xff]
        %v428 = vld [vmem:[%s325 + $0xc8] sm:$0xff]
        %v429 = vld [vmem:[%s325 + $0xd0] sm:$0xff]
        %v430 = vld [vmem:[%s325 + $0xd8] sm:$0xff]
        %v431 = vld [vmem:[%s325 + $0xe0] sm:$0xff]
        %v432 = vld [vmem:[%s325 + $0xe8] sm:$0xff]
        %v433 = vld [vmem:[%s325 + $0xf0] sm:$0xff]
        %v434 = vld [vmem:[%s325 + $0xf8] sm:$0xff]
        %v435 = vld [vmem:[%s325 + $0x100] sm:$0xff]
        %v436 = vld [vmem:[%s325 + $0x108] sm:$0xff]
        %v437 = vld [vmem:[%s325 + $0x110] sm:$0xff]
        %v438 = vld [vmem:[%s325 + $0x118] sm:$0xff]
        %v439 = vld [vmem:[%s325 + $0x120] sm:$0xff]
        %v440 = vld [vmem:[%s325 + $0x128] sm:$0xff]
        %v441 = vld [vmem:[%s325 + $0x130] sm:$0xff]
        %v442 = vld [vmem:[%s325 + $0x138] sm:$0xff]
        %v443 = vld [vmem:[%s325 + $0x140] sm:$0xff]
        %v444 = vld [vmem:[%s325 + $0x148] sm:$0xff]
        %v445 = vld [vmem:[%s325 + $0x150] sm:$0xff]
        %v446 = vld [vmem:[%s325 + $0x158] sm:$0xff]
        %v447 = vld [vmem:[%s325 + $0x160] sm:$0xff]
        %v448 = vld [vmem:[%s325 + $0x168] sm:$0xff]
        %v449 = vld [vmem:[%s325 + $0x170] sm:$0xff]
        %v450 = vld [vmem:[%s325 + $0x178] sm:$0xff]
        %v451 = vld [vmem:[%s325 + $0x180] sm:$0xff]
        %v452 = vld [vmem:[%s325 + $0x188] sm:$0xff]
        %v453 = vld [vmem:[%s325 + $0x190] sm:$0xff]
        %v454 = vld [vmem:[%s325 + $0x198] sm:$0xff]
        %v455 = vld [vmem:[%s325 + $0x1a0] sm:$0xff]
        %v456 = vld [vmem:[%s325 + $0x1a8] sm:$0xff]
        %v457 = vld [vmem:[%s325 + $0x1b0] sm:$0xff]
        %v458 = vld [vmem:[%s325 + $0x1b8] sm:$0xff]
        %v459 = vld [vmem:[%s325 + $0x1c0] sm:$0xff]
        %v460 = vld [vmem:[%s325 + $0x1c8] sm:$0xff]
        %v461 = vld [vmem:[%s325 + $0x1d0] sm:$0xff]
        %v462 = vld [vmem:[%s325 + $0x1d8] sm:$0xff]
        %v463 = vld [vmem:[%s325 + $0x1e0] sm:$0xff]
        %v464 = vld [vmem:[%s325 + $0x1e8] sm:$0xff]
        %v465 = vld [vmem:[%s325 + $0x1f0] sm:$0xff]
        %v466 = vld [vmem:[%s325 + $0x1f8] sm:$0xff]
        %v467 = vld [vmem:[%s325 + $0x200] sm:$0xff]
        %v468 = vld [vmem:[%s325 + $0x208] sm:$0xff]
        %v469 = vld [vmem:[%s325 + $0x210] sm:$0xff]
        %v470 = vld [vmem:[%s325 + $0x218] sm:$0xff]
        %v471 = vld [vmem:[%s325 + $0x220] sm:$0xff]
        %v472 = vld [vmem:[%s325 + $0x228] sm:$0xff]
        %v473 = vld [vmem:[%s325 + $0x230] sm:$0xff]
        %v474 = vld [vmem:[%s325 + $0x238] sm:$0xff]
        %v475 = vld [vmem:[%s325 + $0x240] sm:$0xff]
        %v476 = vld [vmem:[%s325 + $0x248] sm:$0xff]
        %v477 = vld [vmem:[%s325 + $0x250] sm:$0xff]
        %v478 = vld [vmem:[%s325 + $0x258] sm:$0xff]
        %v479 = vld [vmem:[%s325 + $0x260] sm:$0xff]
        %v480 = vld [vmem:[%s325 + $0x268] sm:$0xff]
        %v481 = vld [vmem:[%s325 + $0x270] sm:$0xff]
        %v482 = vld [vmem:[%s325 + $0x278] sm:$0xff]
        %v483 = vld [vmem:[%s325 + $0x280] sm:$0xff]
        %v484 = vld [vmem:[%s325 + $0x288] sm:$0xff]
        %v485 = vld [vmem:[%s325 + $0x290] sm:$0xff]
        %v486 = vld [vmem:[%s325 + $0x298] sm:$0xff]
        %v487 = vld [vmem:[%s325 + $0x2a0] sm:$0xff]
        %v488 = vld [vmem:[%s325 + $0x2a8] sm:$0xff]
        %v489 = vld [vmem:[%s325 + $0x2b0] sm:$0xff]
        %v490 = vld [vmem:[%s325 + $0x2b8] sm:$0xff]
        %v491 = vld [vmem:[%s325 + $0x2c0] sm:$0xff]
        %v492 = vld [vmem:[%s325 + $0x2c8] sm:$0xff]
        %v493 = vld [vmem:[%s325 + $0x2d0] sm:$0xff]
        %v494 = vld [vmem:[%s325 + $0x2d8] sm:$0xff]
        %v495 = vld [vmem:[%s325 + $0x2e0] sm:$0xff]
        %v496 = vld [vmem:[%s325 + $0x2e8] sm:$0xff]
        %v497 = vld [vmem:[%s325 + $0x2f0] sm:$0xff]
        %v498 = vld [vmem:[%s325 + $0x2f8] sm:$0xff]
        %v499 = vld [vmem:[%s325 + $0x300] sm:$0xff]
        %v500 = vld [vmem:[%s325 + $0x308] sm:$0xff]
        %v501 = vld [vmem:[%s325 + $0x310] sm:$0xff]
        %v502 = vld [vmem:[%s325 + $0x318] sm:$0xff]
        %v503 = vld [vmem:[%s325 + $0x320] sm:$0xff]
        %v504 = vld [vmem:[%s325 + $0x328] sm:$0xff]
        %v505 = vld [vmem:[%s325 + $0x330] sm:$0xff]
        %v506 = vld [vmem:[%s325 + $0x338] sm:$0xff]
        %v507 = vld [vmem:[%s325 + $0x340] sm:$0xff]
        %v508 = vld [vmem:[%s325 + $0x348] sm:$0xff]
        %v509 = vld [vmem:[%s325 + $0x350] sm:$0xff]
        %v510 = vld [vmem:[%s325 + $0x358] sm:$0xff]
        %v511 = vld [vmem:[%s325 + $0x360] sm:$0xff]
        %v512 = vld [vmem:[%s325 + $0x368] sm:$0xff]
        %v513 = vld [vmem:[%s325 + $0x370] sm:$0xff]
        %v514 = vld [vmem:[%s325 + $0x378] sm:$0xff]
        %v515 = vld [vmem:[%s325 + $0x380] sm:$0xff]
        %v516 = vld [vmem:[%s325 + $0x388] sm:$0xff]
        %v517 = vld [vmem:[%s325 + $0x390] sm:$0xff]
        %v518 = vld [vmem:[%s325 + $0x398] sm:$0xff]
        %v519 = vld [vmem:[%s325 + $0x3a0] sm:$0xff]
        %v520 = vld [vmem:[%s325 + $0x3a8] sm:$0xff]
        %v521 = vld [vmem:[%s325 + $0x3b0] sm:$0xff]
        %v522 = vld [vmem:[%s325 + $0x3b8] sm:$0xff]
        %v523 = vld [vmem:[%s325 + $0x3c0] sm:$0xff]
        %v524 = vld [vmem:[%s325 + $0x3c8] sm:$0xff]
        %v525 = vld [vmem:[%s325 + $0x3d0] sm:$0xff]
        %v526 = vld [vmem:[%s325 + $0x3d8] sm:$0xff]
        %v527 = vld [vmem:[%s325 + $0x3e0] sm:$0xff]
        %v528 = vld [vmem:[%s325 + $0x3e8] sm:$0xff]
        %v529 = vld [vmem:[%s325 + $0x3f0] sm:$0xff]
        %v530 = vld [vmem:[%s325 + $0x3f8] sm:$0xff]
        %v659 = vunpack.c.l.b16 %v403
        %v660 = vunpack.c.h.b16 %v403
        %v661 = vunpack.c.l.b16 %v404
        %v662 = vunpack.c.h.b16 %v404
        %v663 = vunpack.c.l.b16 %v405
        %v664 = vunpack.c.h.b16 %v405
        %v665 = vunpack.c.l.b16 %v406
        %v666 = vunpack.c.h.b16 %v406
        %v667 = vunpack.c.l.b16 %v407
        %v668 = vunpack.c.h.b16 %v407
        %v669 = vunpack.c.l.b16 %v408
        %v670 = vunpack.c.h.b16 %v408
        %v671 = vunpack.c.l.b16 %v409
        %v672 = vunpack.c.h.b16 %v409
        %v673 = vunpack.c.l.b16 %v410
        %v674 = vunpack.c.h.b16 %v410
        %v675 = vunpack.c.l.b16 %v411
        %v676 = vunpack.c.h.b16 %v411
        %v677 = vunpack.c.l.b16 %v412
        %v678 = vunpack.c.h.b16 %v412
        %v679 = vunpack.c.l.b16 %v413
        %v680 = vunpack.c.h.b16 %v413
        %v681 = vunpack.c.l.b16 %v414
        %v682 = vunpack.c.h.b16 %v414
        %v683 = vunpack.c.l.b16 %v415
        %v684 = vunpack.c.h.b16 %v415
        %v685 = vunpack.c.l.b16 %v416
        %v686 = vunpack.c.h.b16 %v416
        %v687 = vunpack.c.l.b16 %v417
        %v688 = vunpack.c.h.b16 %v417
        %v689 = vunpack.c.l.b16 %v418
        %v690 = vunpack.c.h.b16 %v418
        %v691 = vunpack.c.l.b16 %v419
        %v692 = vunpack.c.h.b16 %v419
        %v693 = vunpack.c.l.b16 %v420
        %v694 = vunpack.c.h.b16 %v420
        %v695 = vunpack.c.l.b16 %v421
        %v696 = vunpack.c.h.b16 %v421
        %v697 = vunpack.c.l.b16 %v422
        %v698 = vunpack.c.h.b16 %v422
        %v699 = vunpack.c.l.b16 %v423
        %v700 = vunpack.c.h.b16 %v423
        %v701 = vunpack.c.l.b16 %v424
        %v702 = vunpack.c.h.b16 %v424
        %v703 = vunpack.c.l.b16 %v425
        %v704 = vunpack.c.h.b16 %v425
        %v705 = vunpack.c.l.b16 %v426
        %v706 = vunpack.c.h.b16 %v426
        %v707 = vunpack.c.l.b16 %v427
        %v708 = vunpack.c.h.b16 %v427
        %v709 = vunpack.c.l.b16 %v428
        %v710 = vunpack.c.h.b16 %v428
        %v711 = vunpack.c.l.b16 %v429
        %v712 = vunpack.c.h.b16 %v429
        %v713 = vunpack.c.l.b16 %v430
        %v714 = vunpack.c.h.b16 %v430
        %v715 = vunpack.c.l.b16 %v431
        %v716 = vunpack.c.h.b16 %v431
        %v717 = vunpack.c.l.b16 %v432
        %v718 = vunpack.c.h.b16 %v432
        %v719 = vunpack.c.l.b16 %v433
        %v720 = vunpack.c.h.b16 %v433
        %v721 = vunpack.c.l.b16 %v434
        %v722 = vunpack.c.h.b16 %v434
        %v723 = vunpack.c.l.b16 %v435
        %v724 = vunpack.c.h.b16 %v435
        %v725 = vunpack.c.l.b16 %v436
        %v726 = vunpack.c.h.b16 %v436
        %v727 = vunpack.c.l.b16 %v437
        %v728 = vunpack.c.h.b16 %v437
        %v729 = vunpack.c.l.b16 %v438
        %v730 = vunpack.c.h.b16 %v438
        %v731 = vunpack.c.l.b16 %v439
        %v732 = vunpack.c.h.b16 %v439
        %v733 = vunpack.c.l.b16 %v440
        %v734 = vunpack.c.h.b16 %v440
        %v735 = vunpack.c.l.b16 %v441
        %v736 = vunpack.c.h.b16 %v441
        %v737 = vunpack.c.l.b16 %v442
        %v738 = vunpack.c.h.b16 %v442
        %v739 = vunpack.c.l.b16 %v443
        %v740 = vunpack.c.h.b16 %v443
        %v741 = vunpack.c.l.b16 %v444
        %v742 = vunpack.c.h.b16 %v444
        %v743 = vunpack.c.l.b16 %v445
        %v744 = vunpack.c.h.b16 %v445
        %v745 = vunpack.c.l.b16 %v446
        %v746 = vunpack.c.h.b16 %v446
        %v747 = vunpack.c.l.b16 %v447
        %v748 = vunpack.c.h.b16 %v447
        %v749 = vunpack.c.l.b16 %v448
        %v750 = vunpack.c.h.b16 %v448
        %v751 = vunpack.c.l.b16 %v449
        %v752 = vunpack.c.h.b16 %v449
        %v753 = vunpack.c.l.b16 %v450
        %v754 = vunpack.c.h.b16 %v450
        %v755 = vunpack.c.l.b16 %v451
        %v756 = vunpack.c.h.b16 %v451
        %v757 = vunpack.c.l.b16 %v452
        %v758 = vunpack.c.h.b16 %v452
        %v759 = vunpack.c.l.b16 %v453
        %v760 = vunpack.c.h.b16 %v453
        %v761 = vunpack.c.l.b16 %v454
        %v762 = vunpack.c.h.b16 %v454
        %v763 = vunpack.c.l.b16 %v455
        %v764 = vunpack.c.h.b16 %v455
        %v765 = vunpack.c.l.b16 %v456
        %v766 = vunpack.c.h.b16 %v456
        %v767 = vunpack.c.l.b16 %v457
        %v768 = vunpack.c.h.b16 %v457
        %v769 = vunpack.c.l.b16 %v458
        %v770 = vunpack.c.h.b16 %v458
        %v771 = vunpack.c.l.b16 %v459
        %v772 = vunpack.c.h.b16 %v459
        %v773 = vunpack.c.l.b16 %v460
        %v774 = vunpack.c.h.b16 %v460
        %v775 = vunpack.c.l.b16 %v461
        %v776 = vunpack.c.h.b16 %v461
        %v777 = vunpack.c.l.b16 %v462
        %v778 = vunpack.c.h.b16 %v462
        %v779 = vunpack.c.l.b16 %v463
        %v780 = vunpack.c.h.b16 %v463
        %v781 = vunpack.c.l.b16 %v464
        %v782 = vunpack.c.h.b16 %v464
        %v783 = vunpack.c.l.b16 %v465
        %v784 = vunpack.c.h.b16 %v465
        %v785 = vunpack.c.l.b16 %v466
        %v786 = vunpack.c.h.b16 %v466
        %v787 = vunpack.c.l.b16 %v467
        %v788 = vunpack.c.h.b16 %v467
        %v789 = vunpack.c.l.b16 %v468
        %v790 = vunpack.c.h.b16 %v468
        %v791 = vunpack.c.l.b16 %v469
        %v792 = vunpack.c.h.b16 %v469
        %v793 = vunpack.c.l.b16 %v470
        %v794 = vunpack.c.h.b16 %v470
        %v795 = vunpack.c.l.b16 %v471
        %v796 = vunpack.c.h.b16 %v471
        %v797 = vunpack.c.l.b16 %v472
        %v798 = vunpack.c.h.b16 %v472
        %v799 = vunpack.c.l.b16 %v473
        %v800 = vunpack.c.h.b16 %v473
        %v801 = vunpack.c.l.b16 %v474
        %v802 = vunpack.c.h.b16 %v474
        %v803 = vunpack.c.l.b16 %v475
        %v804 = vunpack.c.h.b16 %v475
        %v805 = vunpack.c.l.b16 %v476
        %v806 = vunpack.c.h.b16 %v476
        %v807 = vunpack.c.l.b16 %v477
        %v808 = vunpack.c.h.b16 %v477
        %v809 = vunpack.c.l.b16 %v478
        %v810 = vunpack.c.h.b16 %v478
        %v811 = vunpack.c.l.b16 %v479
        %v812 = vunpack.c.h.b16 %v479
        %v813 = vunpack.c.l.b16 %v480
        %v814 = vunpack.c.h.b16 %v480
        %v815 = vunpack.c.l.b16 %v481
        %v816 = vunpack.c.h.b16 %v481
        %v817 = vunpack.c.l.b16 %v482
        %v818 = vunpack.c.h.b16 %v482
        %v819 = vunpack.c.l.b16 %v483
        %v820 = vunpack.c.h.b16 %v483
        %v821 = vunpack.c.l.b16 %v484
        %v822 = vunpack.c.h.b16 %v484
        %v823 = vunpack.c.l.b16 %v485
        %v824 = vunpack.c.h.b16 %v485
        %v825 = vunpack.c.l.b16 %v486
        %v826 = vunpack.c.h.b16 %v486
        %v827 = vunpack.c.l.b16 %v487
        %v828 = vunpack.c.h.b16 %v487
        %v829 = vunpack.c.l.b16 %v488
        %v830 = vunpack.c.h.b16 %v488
        %v831 = vunpack.c.l.b16 %v489
        %v832 = vunpack.c.h.b16 %v489
        %v833 = vunpack.c.l.b16 %v490
        %v834 = vunpack.c.h.b16 %v490
        %v835 = vunpack.c.l.b16 %v491
        %v836 = vunpack.c.h.b16 %v491
        %v837 = vunpack.c.l.b16 %v492
        %v838 = vunpack.c.h.b16 %v492
        %v839 = vunpack.c.l.b16 %v493
        %v840 = vunpack.c.h.b16 %v493
        %v841 = vunpack.c.l.b16 %v494
        %v842 = vunpack.c.h.b16 %v494
        %v843 = vunpack.c.l.b16 %v495
        %v844 = vunpack.c.h.b16 %v495
        %v845 = vunpack.c.l.b16 %v496
        %v846 = vunpack.c.h.b16 %v496
        %v847 = vunpack.c.l.b16 %v497
        %v848 = vunpack.c.h.b16 %v497
        %v849 = vunpack.c.l.b16 %v498
        %v850 = vunpack.c.h.b16 %v498
        %v851 = vunpack.c.l.b16 %v499
        %v852 = vunpack.c.h.b16 %v499
        %v853 = vunpack.c.l.b16 %v500
        %v854 = vunpack.c.h.b16 %v500
        %v855 = vunpack.c.l.b16 %v501
        %v856 = vunpack.c.h.b16 %v501
        %v857 = vunpack.c.l.b16 %v502
        %v858 = vunpack.c.h.b16 %v502
        %v859 = vunpack.c.l.b16 %v503
        %v860 = vunpack.c.h.b16 %v503
        %v861 = vunpack.c.l.b16 %v504
        %v862 = vunpack.c.h.b16 %v504
        %v863 = vunpack.c.l.b16 %v505
        %v864 = vunpack.c.h.b16 %v505
        %v865 = vunpack.c.l.b16 %v506
        %v866 = vunpack.c.h.b16 %v506
        %v867 = vunpack.c.l.b16 %v507
        %v868 = vunpack.c.h.b16 %v507
        %v869 = vunpack.c.l.b16 %v508
        %v870 = vunpack.c.h.b16 %v508
        %v871 = vunpack.c.l.b16 %v509
        %v872 = vunpack.c.h.b16 %v509
        %v873 = vunpack.c.l.b16 %v510
        %v874 = vunpack.c.h.b16 %v510
        %v875 = vunpack.c.l.b16 %v511
        %v876 = vunpack.c.h.b16 %v511
        %v877 = vunpack.c.l.b16 %v512
        %v878 = vunpack.c.h.b16 %v512
        %v879 = vunpack.c.l.b16 %v513
        %v880 = vunpack.c.h.b16 %v513
        %v881 = vunpack.c.l.b16 %v514
        %v882 = vunpack.c.h.b16 %v514
        %v883 = vunpack.c.l.b16 %v515
        %v884 = vunpack.c.h.b16 %v515
        %v885 = vunpack.c.l.b16 %v516
        %v886 = vunpack.c.h.b16 %v516
        %v887 = vunpack.c.l.b16 %v517
        %v888 = vunpack.c.h.b16 %v517
        %v889 = vunpack.c.l.b16 %v518
        %v890 = vunpack.c.h.b16 %v518
        %v891 = vunpack.c.l.b16 %v519
        %v892 = vunpack.c.h.b16 %v519
        %v893 = vunpack.c.l.b16 %v520
        %v894 = vunpack.c.h.b16 %v520
        %v895 = vunpack.c.l.b16 %v521
        %v896 = vunpack.c.h.b16 %v521
        %v897 = vunpack.c.l.b16 %v522
        %v898 = vunpack.c.h.b16 %v522
        %v899 = vunpack.c.l.b16 %v523
        %v900 = vunpack.c.h.b16 %v523
        %v901 = vunpack.c.l.b16 %v524
        %v902 = vunpack.c.h.b16 %v524
        %v903 = vunpack.c.l.b16 %v525
        %v904 = vunpack.c.h.b16 %v525
        %v905 = vunpack.c.l.b16 %v526
        %v906 = vunpack.c.h.b16 %v526
        %v907 = vunpack.c.l.b16 %v527
        %v908 = vunpack.c.h.b16 %v527
        %v909 = vunpack.c.l.b16 %v528
        %v910 = vunpack.c.h.b16 %v528
        %v911 = vunpack.c.l.b16 %v529
        %v912 = vunpack.c.h.b16 %v529
        %v913 = vunpack.c.l.b16 %v530
        %v914 = vunpack.c.h.b16 %v530
        %v915 = vpack.c.b16 %v663, %v659
        %v916 = vpack.c.b16 %v664, %v660
        %v917 = vpack.c.b16 %v665, %v661
        %v918 = vpack.c.b16 %v666, %v662
        %v919 = vpack.c.b16 %v671, %v667
        %v920 = vpack.c.b16 %v672, %v668
        %v921 = vpack.c.b16 %v673, %v669
        %v922 = vpack.c.b16 %v674, %v670
        %v923 = vpack.c.b16 %v679, %v675
        %v924 = vpack.c.b16 %v680, %v676
        %v925 = vpack.c.b16 %v681, %v677
        %v926 = vpack.c.b16 %v682, %v678
        %v927 = vpack.c.b16 %v687, %v683
        %v928 = vpack.c.b16 %v688, %v684
        %v929 = vpack.c.b16 %v689, %v685
        %v930 = vpack.c.b16 %v690, %v686
        %v931 = vpack.c.b16 %v695, %v691
        %v932 = vpack.c.b16 %v696, %v692
        %v933 = vpack.c.b16 %v697, %v693
        %v934 = vpack.c.b16 %v698, %v694
        %v935 = vpack.c.b16 %v703, %v699
        %v936 = vpack.c.b16 %v704, %v700
        %v937 = vpack.c.b16 %v705, %v701
        %v938 = vpack.c.b16 %v706, %v702
        %v939 = vpack.c.b16 %v711, %v707
        %v940 = vpack.c.b16 %v712, %v708
        %v941 = vpack.c.b16 %v713, %v709
        %v942 = vpack.c.b16 %v714, %v710
        %v943 = vpack.c.b16 %v719, %v715
        %v944 = vpack.c.b16 %v720, %v716
        %v945 = vpack.c.b16 %v721, %v717
        %v946 = vpack.c.b16 %v722, %v718
        %v947 = vpack.c.b16 %v727, %v723
        %v948 = vpack.c.b16 %v728, %v724
        %v949 = vpack.c.b16 %v729, %v725
        %v950 = vpack.c.b16 %v730, %v726
        %v951 = vpack.c.b16 %v735, %v731
        %v952 = vpack.c.b16 %v736, %v732
        %v953 = vpack.c.b16 %v737, %v733
        %v954 = vpack.c.b16 %v738, %v734
        %v955 = vpack.c.b16 %v743, %v739
        %v956 = vpack.c.b16 %v744, %v740
        %v957 = vpack.c.b16 %v745, %v741
        %v958 = vpack.c.b16 %v746, %v742
        %v959 = vpack.c.b16 %v751, %v747
        %v960 = vpack.c.b16 %v752, %v748
        %v961 = vpack.c.b16 %v753, %v749
        %v962 = vpack.c.b16 %v754, %v750
        %v963 = vpack.c.b16 %v759, %v755
        %v964 = vpack.c.b16 %v760, %v756
        %v965 = vpack.c.b16 %v761, %v757
        %v966 = vpack.c.b16 %v762, %v758
        %v967 = vpack.c.b16 %v767, %v763
        %v968 = vpack.c.b16 %v768, %v764
        %v969 = vpack.c.b16 %v769, %v765
        %v970 = vpack.c.b16 %v770, %v766
        %v971 = vpack.c.b16 %v775, %v771
        %v972 = vpack.c.b16 %v776, %v772
        %v973 = vpack.c.b16 %v777, %v773
        %v974 = vpack.c.b16 %v778, %v774
        %v975 = vpack.c.b16 %v783, %v779
        %v976 = vpack.c.b16 %v784, %v780
        %v977 = vpack.c.b16 %v785, %v781
        %v978 = vpack.c.b16 %v786, %v782
        %v979 = vpack.c.b16 %v791, %v787
        %v980 = vpack.c.b16 %v792, %v788
        %v981 = vpack.c.b16 %v793, %v789
        %v982 = vpack.c.b16 %v794, %v790
        %v983 = vpack.c.b16 %v799, %v795
        %v984 = vpack.c.b16 %v800, %v796
        %v985 = vpack.c.b16 %v801, %v797
        %v986 = vpack.c.b16 %v802, %v798
        %v987 = vpack.c.b16 %v807, %v803
        %v988 = vpack.c.b16 %v808, %v804
        %v989 = vpack.c.b16 %v809, %v805
        %v990 = vpack.c.b16 %v810, %v806
        %v991 = vpack.c.b16 %v815, %v811
        %v992 = vpack.c.b16 %v816, %v812
        %v993 = vpack.c.b16 %v817, %v813
        %v994 = vpack.c.b16 %v818, %v814
        %v995 = vpack.c.b16 %v823, %v819
        %v996 = vpack.c.b16 %v824, %v820
        %v997 = vpack.c.b16 %v825, %v821
        %v998 = vpack.c.b16 %v826, %v822
        %v999 = vpack.c.b16 %v831, %v827
        %v1000 = vpack.c.b16 %v832, %v828
        %v1001 = vpack.c.b16 %v833, %v829
        %v1002 = vpack.c.b16 %v834, %v830
        %v1003 = vpack.c.b16 %v839, %v835
        %v1004 = vpack.c.b16 %v840, %v836
        %v1005 = vpack.c.b16 %v841, %v837
        %v1006 = vpack.c.b16 %v842, %v838
        %v1007 = vpack.c.b16 %v847, %v843
        %v1008 = vpack.c.b16 %v848, %v844
        %v1009 = vpack.c.b16 %v849, %v845
        %v1010 = vpack.c.b16 %v850, %v846
        %v1011 = vpack.c.b16 %v855, %v851
        %v1012 = vpack.c.b16 %v856, %v852
        %v1013 = vpack.c.b16 %v857, %v853
        %v1014 = vpack.c.b16 %v858, %v854
        %v1015 = vpack.c.b16 %v863, %v859
        %v1016 = vpack.c.b16 %v864, %v860
        %v1017 = vpack.c.b16 %v865, %v861
        %v1018 = vpack.c.b16 %v866, %v862
        %v1019 = vpack.c.b16 %v871, %v867
        %v1020 = vpack.c.b16 %v872, %v868
        %v1021 = vpack.c.b16 %v873, %v869
        %v1022 = vpack.c.b16 %v874, %v870
        %v1023 = vpack.c.b16 %v879, %v875
        %v1024 = vpack.c.b16 %v880, %v876
        %v1025 = vpack.c.b16 %v881, %v877
        %v1026 = vpack.c.b16 %v882, %v878
        %v1027 = vpack.c.b16 %v887, %v883
        %v1028 = vpack.c.b16 %v888, %v884
        %v1029 = vpack.c.b16 %v889, %v885
        %v1030 = vpack.c.b16 %v890, %v886
        %v1031 = vpack.c.b16 %v895, %v891
        %v1032 = vpack.c.b16 %v896, %v892
        %v1033 = vpack.c.b16 %v897, %v893
        %v1034 = vpack.c.b16 %v898, %v894
        %v1035 = vpack.c.b16 %v903, %v899
        %v1036 = vpack.c.b16 %v904, %v900
        %v1037 = vpack.c.b16 %v905, %v901
        %v1038 = vpack.c.b16 %v906, %v902
        %v1039 = vpack.c.b16 %v911, %v907
        %v1040 = vpack.c.b16 %v912, %v908
        %v1041 = vpack.c.b16 %v913, %v909
        %v1042 = vpack.c.b16 %v914, %v910
        %1171 = vmatprep.subr.bf16.mxu0 %v916
        %1172 = vmatpush1.bf16.msra.mxu0 %v915
        %1173 = vmatprep.subr.bf16.mxu0 %v920
        %1174 = vmatpush1.bf16.msra.mxu0 %v919
        %1175 = vmatprep.subr.bf16.mxu0 %v924
        %1176 = vmatpush1.bf16.msra.mxu0 %v923
        %1177 = vmatprep.subr.bf16.mxu0 %v928
        %1178 = vmatpush1.bf16.msra.mxu0 %v927
        %1179 = vmatprep.subr.bf16.mxu0 %v932
        %1180 = vmatpush1.bf16.msra.mxu0 %v931
        %1181 = vmatprep.subr.bf16.mxu0 %v936
        %1182 = vmatpush1.bf16.msra.mxu0 %v935
        %1183 = vmatprep.subr.bf16.mxu0 %v940
        %1184 = vmatpush1.bf16.msra.mxu0 %v939
        %1185 = vmatprep.subr.bf16.mxu0 %v944
        %1186 = vmatpush1.bf16.msra.mxu0 %v943
        %1187 = vmatprep.subr.bf16.mxu0 %v948
        %1188 = vmatpush1.bf16.msra.mxu0 %v947
        %1189 = vmatprep.subr.bf16.mxu0 %v952
        %1190 = vmatpush1.bf16.msra.mxu0 %v951
        %1191 = vmatprep.subr.bf16.mxu0 %v956
        %1192 = vmatpush1.bf16.msra.mxu0 %v955
        %1193 = vmatprep.subr.bf16.mxu0 %v960
        %1194 = vmatpush1.bf16.msra.mxu0 %v959
        %1195 = vmatprep.subr.bf16.mxu0 %v964
        %1196 = vmatpush1.bf16.msra.mxu0 %v963
        %1197 = vmatprep.subr.bf16.mxu0 %v968
        %1198 = vmatpush1.bf16.msra.mxu0 %v967
        %1199 = vmatprep.subr.bf16.mxu0 %v972
        %1200 = vmatpush1.bf16.msra.mxu0 %v971
        %1201 = vmatprep.subr.bf16.mxu0 %v976
        %1202 = vmatpush1.bf16.msra.mxu0 %v975
        %1203 = vmatprep.mubr.bf16.mxu0 %v400
        %1204 = vmatmul.mubr.bf16.gmra.mrb[0].mxu0 %v399
        %v1205 = vpop.f32.mrb[0].mxu0
        %v1206 = vadd.f32 0.0, %v1205
        %v1207 = vpop.f32.mrb[0].mxu0
        %v1208 = vadd.f32 0.0, %v1207
        %v1209 = vpop.f32.mrb[0].mxu0
        %v1210 = vpop.f32.mrb[0].mxu0
        %1211 = vdwg.mxu0
        %1212 = vmatprep.subr.bf16.mxu0 %v980
        %1213 = vmatpush1.bf16.msra.mxu0 %v979
        %1214 = vmatprep.subr.bf16.mxu0 %v984
        %1215 = vmatpush1.bf16.msra.mxu0 %v983
        %1216 = vmatprep.subr.bf16.mxu0 %v988
        %1217 = vmatpush1.bf16.msra.mxu0 %v987
        %1218 = vmatprep.subr.bf16.mxu0 %v992
        %1219 = vmatpush1.bf16.msra.mxu0 %v991
        %1220 = vmatprep.subr.bf16.mxu0 %v996
        %1221 = vmatpush1.bf16.msra.mxu0 %v995
        %1222 = vmatprep.subr.bf16.mxu0 %v1000
        %1223 = vmatpush1.bf16.msra.mxu0 %v999
        %1224 = vmatprep.subr.bf16.mxu0 %v1004
        %1225 = vmatpush1.bf16.msra.mxu0 %v1003
        %1226 = vmatprep.subr.bf16.mxu0 %v1008
        %1227 = vmatpush1.bf16.msra.mxu0 %v1007
        %1228 = vmatprep.subr.bf16.mxu0 %v1012
        %1229 = vmatpush1.bf16.msra.mxu0 %v1011
        %1230 = vmatprep.subr.bf16.mxu0 %v1016
        %1231 = vmatpush1.bf16.msra.mxu0 %v1015
        %1232 = vmatprep.subr.bf16.mxu0 %v1020
        %1233 = vmatpush1.bf16.msra.mxu0 %v1019
        %1234 = vmatprep.subr.bf16.mxu0 %v1024
        %1235 = vmatpush1.bf16.msra.mxu0 %v1023
        %1236 = vmatprep.subr.bf16.mxu0 %v1028
        %1237 = vmatpush1.bf16.msra.mxu0 %v1027
        %1238 = vmatprep.subr.bf16.mxu0 %v1032
        %1239 = vmatpush1.bf16.msra.mxu0 %v1031
        %1240 = vmatprep.subr.bf16.mxu0 %v1036
        %1241 = vmatpush1.bf16.msra.mxu0 %v1035
        %1242 = vmatprep.subr.bf16.mxu0 %v1040
        %1243 = vmatpush1.bf16.msra.mxu0 %v1039
        %1244 = vmatprep.mubr.bf16.mxu0 %v402
        %1245 = vmatmul.mubr.bf16.gmra.mrb[0].mxu0 %v401
        %v1246 = vpop.f32.mrb[0].mxu0
        %v1247 = vadd.f32 %v1206, %v1246
        %v1248 = vpop.f32.mrb[0].mxu0
        %v1249 = vadd.f32 %v1208, %v1248
        %v1250 = vpop.f32.mrb[0].mxu0
        %v1251 = vpop.f32.mrb[0].mxu0
        %1252 = vdwg.mxu0
        %1253 = vmatprep.subr.bf16.mxu0 %v918
        %1254 = vmatpush1.bf16.msra.mxu0 %v917
        %1255 = vmatprep.subr.bf16.mxu0 %v922
        %1256 = vmatpush1.bf16.msra.mxu0 %v921
        %1257 = vmatprep.subr.bf16.mxu0 %v926
        %1258 = vmatpush1.bf16.msra.mxu0 %v925
        %1259 = vmatprep.subr.bf16.mxu0 %v930
        %1260 = vmatpush1.bf16.msra.mxu0 %v929
        %1261 = vmatprep.subr.bf16.mxu0 %v934
        %1262 = vmatpush1.bf16.msra.mxu0 %v933
        %1263 = vmatprep.subr.bf16.mxu0 %v938
        %1264 = vmatpush1.bf16.msra.mxu0 %v937
        %1265 = vmatprep.subr.bf16.mxu0 %v942
        %1266 = vmatpush1.bf16.msra.mxu0 %v941
        %1267 = vmatprep.subr.bf16.mxu0 %v946
        %1268 = vmatpush1.bf16.msra.mxu0 %v945
        %1269 = vmatprep.subr.bf16.mxu0 %v950
        %1270 = vmatpush1.bf16.msra.mxu0 %v949
        %1271 = vmatprep.subr.bf16.mxu0 %v954
        %1272 = vmatpush1.bf16.msra.mxu0 %v953
        %1273 = vmatprep.subr.bf16.mxu0 %v958
        %1274 = vmatpush1.bf16.msra.mxu0 %v957
        %1275 = vmatprep.subr.bf16.mxu0 %v962
        %1276 = vmatpush1.bf16.msra.mxu0 %v961
        %1277 = vmatprep.subr.bf16.mxu0 %v966
        %1278 = vmatpush1.bf16.msra.mxu0 %v965
        %1279 = vmatprep.subr.bf16.mxu0 %v970
        %1280 = vmatpush1.bf16.msra.mxu0 %v969
        %1281 = vmatprep.subr.bf16.mxu0 %v974
        %1282 = vmatpush1.bf16.msra.mxu0 %v973
        %1283 = vmatprep.subr.bf16.mxu0 %v978
        %1284 = vmatpush1.bf16.msra.mxu0 %v977
        %1285 = vmatprep.mubr.bf16.mxu0 %v400
        %1286 = vmatmul.mubr.bf16.gmra.mrb[0].mxu0 %v399
        %v1287 = vpop.f32.mrb[0].mxu0
        %v1288 = vadd.f32 0.0, %v1287
        %v1289 = vpop.f32.mrb[0].mxu0
        %v1290 = vadd.f32 0.0, %v1289
        %v1291 = vpop.f32.mrb[0].mxu0
        %v1292 = vpop.f32.mrb[0].mxu0
        %1293 = vdwg.mxu0
        %1294 = vmatprep.subr.bf16.mxu0 %v982
        %1295 = vmatpush1.bf16.msra.mxu0 %v981
        %1296 = vmatprep.subr.bf16.mxu0 %v986
        %1297 = vmatpush1.bf16.msra.mxu0 %v985
        %1298 = vmatprep.subr.bf16.mxu0 %v990
        %1299 = vmatpush1.bf16.msra.mxu0 %v989
        %1300 = vmatprep.subr.bf16.mxu0 %v994
        %1301 = vmatpush1.bf16.msra.mxu0 %v993
        %1302 = vmatprep.subr.bf16.mxu0 %v998
        %1303 = vmatpush1.bf16.msra.mxu0 %v997
        %1304 = vmatprep.subr.bf16.mxu0 %v1002
        %1305 = vmatpush1.bf16.msra.mxu0 %v1001
        %1306 = vmatprep.subr.bf16.mxu0 %v1006
        %1307 = vmatpush1.bf16.msra.mxu0 %v1005
        %1308 = vmatprep.subr.bf16.mxu0 %v1010
        %1309 = vmatpush1.bf16.msra.mxu0 %v1009
        %1310 = vmatprep.subr.bf16.mxu0 %v1014
        %1311 = vmatpush1.bf16.msra.mxu0 %v1013
        %1312 = vmatprep.subr.bf16.mxu0 %v1018
        %1313 = vmatpush1.bf16.msra.mxu0 %v1017
        %1314 = vmatprep.subr.bf16.mxu0 %v1022
        %1315 = vmatpush1.bf16.msra.mxu0 %v1021
        %1316 = vmatprep.subr.bf16.mxu0 %v1026
        %1317 = vmatpush1.bf16.msra.mxu0 %v1025
        %1318 = vmatprep.subr.bf16.mxu0 %v1030
        %1319 = vmatpush1.bf16.msra.mxu0 %v1029
        %1320 = vmatprep.subr.bf16.mxu0 %v1034
        %1321 = vmatpush1.bf16.msra.mxu0 %v1033
        %1322 = vmatprep.subr.bf16.mxu0 %v1038
        %1323 = vmatpush1.bf16.msra.mxu0 %v1037
        %1324 = vmatprep.subr.bf16.mxu0 %v1042
        %1325 = vmatpush1.bf16.msra.mxu0 %v1041
        %1326 = vmatprep.mubr.bf16.mxu0 %v402
        %1327 = vmatmul.mubr.bf16.gmra.mrb[0].mxu0 %v401
        %v1328 = vpop.f32.mrb[0].mxu0
        %v1329 = vadd.f32 %v1288, %v1328
        %v1330 = vpop.f32.mrb[0].mxu0
        %v1331 = vadd.f32 %v1290, %v1330
        %v1332 = vpop.f32.mrb[0].mxu0
        %v1333 = vpop.f32.mrb[0].mxu0
        %1334 = vdwg.mxu0
        %v1339 = vcombine.low %v1247, %v1249
        %v1340 = vcombine.low %v1329, %v1331
        %v1342 = vunpack.c.l.s4 1983009808
        %v1343 = vunpack.c.0.s8 %v1342
        %v1344 = vlaneseq
        %v1345 = vshrl.u32 %v1344, 7
        %v1346 = vsub.s32 %v1343, %v1345
        %v1347 = vrot.slane %v1339, %v1346
        %v1349 = vunpack.c.l.s4 1983009808
        %v1350 = vunpack.c.0.s8 %v1349
        %v1351 = vlaneseq
        %v1352 = vshrl.u32 %v1351, 7
        %v1353 = vsub.s32 %v1350, %v1352
        %v1354 = vrot.slane %v1340, %v1353
        %v1355 = vcombine.low %v1347, %v1354
        %v1357 = vadd.f32 %v375, %v1355
        %1358 = vst [vmem:[#allocation2] sm:$0xff] %v1357
        %p1359 = scmp.eq.s32.totalorder %s31, 1
        // Predicated region
        $region65: #{tpu_custom_call.1} parent=47 // pred_check
          %p1360 = pneg %p1359
        $region66: #{tpu_custom_call.1} parent=47 // pred_check_branch
          %1362 = sbr.rel (%p1360) target = $region68
        $region67: #{tpu_custom_call.1} parent=47 // pred_region
          %v1363 = vld [vmem:[#allocation2] sm:$0xff]
          %v1364 = vld [vmem:[%s2] sm:$0xf]
          %v1366 = vlaneseq
          %v1367 = vshrl.u32 %v1366, 7
          %v1368 = vsub.s32 0, %v1367
          %v1369 = vrot.slane %v1364, %v1368
          %v1370 = vlaneseq
          %v1371 = vshrl.u32 %v1370, 7
          %v1372 = vsub.s32 1, %v1371
          %v1373 = vrot.slane %v1364, %v1372
          %v1374 = vlaneseq
          %v1375 = vshrl.u32 %v1374, 7
          %v1376 = vsub.s32 2, %v1375
          %v1377 = vrot.slane %v1364, %v1376
          %v1378 = vlaneseq
          %v1379 = vshrl.u32 %v1378, 7
          %v1380 = vsub.s32 3, %v1379
          %v1381 = vrot.slane %v1364, %v1380
          %v1382 = vcombine.low %v1369, %v1373
          %v1383 = vcombine.low %v1377, %v1381
          %v1385 = vunpack.c.l.s4 1983009808
          %v1386 = vunpack.c.0.s8 %v1385
          %v1387 = vlaneseq
          %v1388 = vshrl.u32 %v1387, 7
          %v1389 = vsub.s32 %v1386, %v1388
          %v1390 = vrot.slane %v1382, %v1389
          %v1392 = vunpack.c.l.s4 1983009808
          %v1393 = vunpack.c.0.s8 %v1392
          %v1394 = vlaneseq
          %v1395 = vshrl.u32 %v1394, 7
          %v1396 = vsub.s32 %v1393, %v1395
          %v1397 = vrot.slane %v1383, %v1396
          %v1398 = vcombine.low %v1390, %v1397
          %v1400 = vadd.f32 %v1363, %v1398
          %vm1401 = vcmp.gt.f32.partialorder %v1400, 0.0
          %v1402 = vmul.f32 %v1400, 0.2
          %v1403 = vsel %vm1401, %v1400, %v1402
          %v1405 = vcombine.high %v1403, %v1403
          %v1407 = vunpack.c.l.s4 1983009808
          %v1408 = vunpack.c.0.s8 %v1407
          %v1409 = vlaneseq
          %v1410 = vshrl.u32 %v1409, 7
          %v1411 = vsub.s32 %v1408, %v1410
          %v1412 = vrot.slane %v1403, %v1411
          %v1414 = vunpack.c.l.s4 1983009808
          %v1415 = vunpack.c.0.s8 %v1414
          %v1416 = vlaneseq
          %v1417 = vshrl.u32 %v1416, 7
          %v1418 = vsub.s32 %v1415, %v1417
          %v1419 = vrot.slane %v1405, %v1418
          %v1420 = vcombine.high %v1412, %v1412
          %v1421 = vcombine.high %v1419, %v1419
          %v1426 = vpack.c.bf16 %v1412, %v1412
          %v1427 = vpack.c.bf16 %v1420, %v1420
          %v1428 = vpack.c.bf16 %v1419, %v1419
          %v1429 = vpack.c.bf16 %v1421, %v1421
          %v1430 = vld [vmem:[#allocation8] sm:$0xff]
          %v1431 = vld [vmem:[#allocation8 + $0x8] sm:$0xff]
          %v1432 = vld [vmem:[#allocation8 + $0x10] sm:$0xff]
          %v1433 = vld [vmem:[#allocation8 + $0x18] sm:$0xff]
          %v1434 = vld [vmem:[#allocation8 + $0x20] sm:$0xff]
          %v1435 = vld [vmem:[#allocation8 + $0x28] sm:$0xff]
          %v1436 = vld [vmem:[#allocation8 + $0x30] sm:$0xff]
          %v1437 = vld [vmem:[#allocation8 + $0x38] sm:$0xff]
          %v1438 = vld [vmem:[#allocation8 + $0x40] sm:$0xff]
          %v1439 = vld [vmem:[#allocation8 + $0x48] sm:$0xff]
          %v1440 = vld [vmem:[#allocation8 + $0x50] sm:$0xff]
          %v1441 = vld [vmem:[#allocation8 + $0x58] sm:$0xff]
          %v1442 = vld [vmem:[#allocation8 + $0x60] sm:$0xff]
          %v1443 = vld [vmem:[#allocation8 + $0x68] sm:$0xff]
          %v1444 = vld [vmem:[#allocation8 + $0x70] sm:$0xff]
          %v1445 = vld [vmem:[#allocation8 + $0x78] sm:$0xff]
          %v1446 = vld [vmem:[#allocation8 + $0x80] sm:$0xff]
          %v1447 = vld [vmem:[#allocation8 + $0x88] sm:$0xff]
          %v1448 = vld [vmem:[#allocation8 + $0x90] sm:$0xff]
          %v1449 = vld [vmem:[#allocation8 + $0x98] sm:$0xff]
          %v1450 = vld [vmem:[#allocation8 + $0xa0] sm:$0xff]
          %v1451 = vld [vmem:[#allocation8 + $0xa8] sm:$0xff]
          %v1452 = vld [vmem:[#allocation8 + $0xb0] sm:$0xff]
          %v1453 = vld [vmem:[#allocation8 + $0xb8] sm:$0xff]
          %v1454 = vld [vmem:[#allocation8 + $0xc0] sm:$0xff]
          %v1455 = vld [vmem:[#allocation8 + $0xc8] sm:$0xff]
          %v1456 = vld [vmem:[#allocation8 + $0xd0] sm:$0xff]
          %v1457 = vld [vmem:[#allocation8 + $0xd8] sm:$0xff]
          %v1458 = vld [vmem:[#allocation8 + $0xe0] sm:$0xff]
          %v1459 = vld [vmem:[#allocation8 + $0xe8] sm:$0xff]
          %v1460 = vld [vmem:[#allocation8 + $0xf0] sm:$0xff]
          %v1461 = vld [vmem:[#allocation8 + $0xf8] sm:$0xff]
          %v1462 = vld [vmem:[#allocation8 + $0x100] sm:$0xff]
          %v1463 = vld [vmem:[#allocation8 + $0x108] sm:$0xff]
          %v1464 = vld [vmem:[#allocation8 + $0x110] sm:$0xff]
          %v1465 = vld [vmem:[#allocation8 + $0x118] sm:$0xff]
          %v1466 = vld [vmem:[#allocation8 + $0x120] sm:$0xff]
          %v1467 = vld [vmem:[#allocation8 + $0x128] sm:$0xff]
          %v1468 = vld [vmem:[#allocation8 + $0x130] sm:$0xff]
          %v1469 = vld [vmem:[#allocation8 + $0x138] sm:$0xff]
          %v1470 = vld [vmem:[#allocation8 + $0x140] sm:$0xff]
          %v1471 = vld [vmem:[#allocation8 + $0x148] sm:$0xff]
          %v1472 = vld [vmem:[#allocation8 + $0x150] sm:$0xff]
          %v1473 = vld [vmem:[#allocation8 + $0x158] sm:$0xff]
          %v1474 = vld [vmem:[#allocation8 + $0x160] sm:$0xff]
          %v1475 = vld [vmem:[#allocation8 + $0x168] sm:$0xff]
          %v1476 = vld [vmem:[#allocation8 + $0x170] sm:$0xff]
          %v1477 = vld [vmem:[#allocation8 + $0x178] sm:$0xff]
          %v1478 = vld [vmem:[#allocation8 + $0x180] sm:$0xff]
          %v1479 = vld [vmem:[#allocation8 + $0x188] sm:$0xff]
          %v1480 = vld [vmem:[#allocation8 + $0x190] sm:$0xff]
          %v1481 = vld [vmem:[#allocation8 + $0x198] sm:$0xff]
          %v1482 = vld [vmem:[#allocation8 + $0x1a0] sm:$0xff]
          %v1483 = vld [vmem:[#allocation8 + $0x1a8] sm:$0xff]
          %v1484 = vld [vmem:[#allocation8 + $0x1b0] sm:$0xff]
          %v1485 = vld [vmem:[#allocation8 + $0x1b8] sm:$0xff]
          %v1486 = vld [vmem:[#allocation8 + $0x1c0] sm:$0xff]
          %v1487 = vld [vmem:[#allocation8 + $0x1c8] sm:$0xff]
          %v1488 = vld [vmem:[#allocation8 + $0x1d0] sm:$0xff]
          %v1489 = vld [vmem:[#allocation8 + $0x1d8] sm:$0xff]
          %v1490 = vld [vmem:[#allocation8 + $0x1e0] sm:$0xff]
          %v1491 = vld [vmem:[#allocation8 + $0x1e8] sm:$0xff]
          %v1492 = vld [vmem:[#allocation8 + $0x1f0] sm:$0xff]
          %v1493 = vld [vmem:[#allocation8 + $0x1f8] sm:$0xff]
          %v1494 = vld [vmem:[%s4] sm:$0x3]
          %v1496 = vlaneseq
          %v1497 = vshrl.u32 %v1496, 7
          %v1498 = vsub.s32 0, %v1497
          %v1499 = vrot.slane %v1494, %v1498
          %v1500 = vlaneseq
          %v1501 = vshrl.u32 %v1500, 7
          %v1502 = vsub.s32 1, %v1501
          %v1503 = vrot.slane %v1494, %v1502
          %v1570 = vunpack.c.l.b16 %v1430
          %v1571 = vunpack.c.h.b16 %v1430
          %v1572 = vunpack.c.l.b16 %v1431
          %v1573 = vunpack.c.h.b16 %v1431
          %v1574 = vunpack.c.l.b16 %v1432
          %v1575 = vunpack.c.h.b16 %v1432
          %v1576 = vunpack.c.l.b16 %v1433
          %v1577 = vunpack.c.h.b16 %v1433
          %v1578 = vunpack.c.l.b16 %v1434
          %v1579 = vunpack.c.h.b16 %v1434
          %v1580 = vunpack.c.l.b16 %v1435
          %v1581 = vunpack.c.h.b16 %v1435
          %v1582 = vunpack.c.l.b16 %v1436
          %v1583 = vunpack.c.h.b16 %v1436
          %v1584 = vunpack.c.l.b16 %v1437
          %v1585 = vunpack.c.h.b16 %v1437
          %v1586 = vunpack.c.l.b16 %v1438
          %v1587 = vunpack.c.h.b16 %v1438
          %v1588 = vunpack.c.l.b16 %v1439
          %v1589 = vunpack.c.h.b16 %v1439
          %v1590 = vunpack.c.l.b16 %v1440
          %v1591 = vunpack.c.h.b16 %v1440
          %v1592 = vunpack.c.l.b16 %v1441
          %v1593 = vunpack.c.h.b16 %v1441
          %v1594 = vunpack.c.l.b16 %v1442
          %v1595 = vunpack.c.h.b16 %v1442
          %v1596 = vunpack.c.l.b16 %v1443
          %v1597 = vunpack.c.h.b16 %v1443
          %v1598 = vunpack.c.l.b16 %v1444
          %v1599 = vunpack.c.h.b16 %v1444
          %v1600 = vunpack.c.l.b16 %v1445
          %v1601 = vunpack.c.h.b16 %v1445
          %v1602 = vunpack.c.l.b16 %v1446
          %v1603 = vunpack.c.h.b16 %v1446
          %v1604 = vunpack.c.l.b16 %v1447
          %v1605 = vunpack.c.h.b16 %v1447
          %v1606 = vunpack.c.l.b16 %v1448
          %v1607 = vunpack.c.h.b16 %v1448
          %v1608 = vunpack.c.l.b16 %v1449
          %v1609 = vunpack.c.h.b16 %v1449
          %v1610 = vunpack.c.l.b16 %v1450
          %v1611 = vunpack.c.h.b16 %v1450
          %v1612 = vunpack.c.l.b16 %v1451
          %v1613 = vunpack.c.h.b16 %v1451
          %v1614 = vunpack.c.l.b16 %v1452
          %v1615 = vunpack.c.h.b16 %v1452
          %v1616 = vunpack.c.l.b16 %v1453
          %v1617 = vunpack.c.h.b16 %v1453
          %v1618 = vunpack.c.l.b16 %v1454
          %v1619 = vunpack.c.h.b16 %v1454
          %v1620 = vunpack.c.l.b16 %v1455
          %v1621 = vunpack.c.h.b16 %v1455
          %v1622 = vunpack.c.l.b16 %v1456
          %v1623 = vunpack.c.h.b16 %v1456
          %v1624 = vunpack.c.l.b16 %v1457
          %v1625 = vunpack.c.h.b16 %v1457
          %v1626 = vunpack.c.l.b16 %v1458
          %v1627 = vunpack.c.h.b16 %v1458
          %v1628 = vunpack.c.l.b16 %v1459
          %v1629 = vunpack.c.h.b16 %v1459
          %v1630 = vunpack.c.l.b16 %v1460
          %v1631 = vunpack.c.h.b16 %v1460
          %v1632 = vunpack.c.l.b16 %v1461
          %v1633 = vunpack.c.h.b16 %v1461
          %v1634 = vunpack.c.l.b16 %v1462
          %v1635 = vunpack.c.h.b16 %v1462
          %v1636 = vunpack.c.l.b16 %v1463
          %v1637 = vunpack.c.h.b16 %v1463
          %v1638 = vunpack.c.l.b16 %v1464
          %v1639 = vunpack.c.h.b16 %v1464
          %v1640 = vunpack.c.l.b16 %v1465
          %v1641 = vunpack.c.h.b16 %v1465
          %v1642 = vunpack.c.l.b16 %v1466
          %v1643 = vunpack.c.h.b16 %v1466
          %v1644 = vunpack.c.l.b16 %v1467
          %v1645 = vunpack.c.h.b16 %v1467
          %v1646 = vunpack.c.l.b16 %v1468
          %v1647 = vunpack.c.h.b16 %v1468
          %v1648 = vunpack.c.l.b16 %v1469
          %v1649 = vunpack.c.h.b16 %v1469
          %v1650 = vunpack.c.l.b16 %v1470
          %v1651 = vunpack.c.h.b16 %v1470
          %v1652 = vunpack.c.l.b16 %v1471
          %v1653 = vunpack.c.h.b16 %v1471
          %v1654 = vunpack.c.l.b16 %v1472
          %v1655 = vunpack.c.h.b16 %v1472
          %v1656 = vunpack.c.l.b16 %v1473
          %v1657 = vunpack.c.h.b16 %v1473
          %v1658 = vunpack.c.l.b16 %v1474
          %v1659 = vunpack.c.h.b16 %v1474
          %v1660 = vunpack.c.l.b16 %v1475
          %v1661 = vunpack.c.h.b16 %v1475
          %v1662 = vunpack.c.l.b16 %v1476
          %v1663 = vunpack.c.h.b16 %v1476
          %v1664 = vunpack.c.l.b16 %v1477
          %v1665 = vunpack.c.h.b16 %v1477
          %v1666 = vunpack.c.l.b16 %v1478
          %v1667 = vunpack.c.h.b16 %v1478
          %v1668 = vunpack.c.l.b16 %v1479
          %v1669 = vunpack.c.h.b16 %v1479
          %v1670 = vunpack.c.l.b16 %v1480
          %v1671 = vunpack.c.h.b16 %v1480
          %v1672 = vunpack.c.l.b16 %v1481
          %v1673 = vunpack.c.h.b16 %v1481
          %v1674 = vunpack.c.l.b16 %v1482
          %v1675 = vunpack.c.h.b16 %v1482
          %v1676 = vunpack.c.l.b16 %v1483
          %v1677 = vunpack.c.h.b16 %v1483
          %v1678 = vunpack.c.l.b16 %v1484
          %v1679 = vunpack.c.h.b16 %v1484
          %v1680 = vunpack.c.l.b16 %v1485
          %v1681 = vunpack.c.h.b16 %v1485
          %v1682 = vunpack.c.l.b16 %v1486
          %v1683 = vunpack.c.h.b16 %v1486
          %v1684 = vunpack.c.l.b16 %v1487
          %v1685 = vunpack.c.h.b16 %v1487
          %v1686 = vunpack.c.l.b16 %v1488
          %v1687 = vunpack.c.h.b16 %v1488
          %v1688 = vunpack.c.l.b16 %v1489
          %v1689 = vunpack.c.h.b16 %v1489
          %v1690 = vunpack.c.l.b16 %v1490
          %v1691 = vunpack.c.h.b16 %v1490
          %v1692 = vunpack.c.l.b16 %v1491
          %v1693 = vunpack.c.h.b16 %v1491
          %v1694 = vunpack.c.l.b16 %v1492
          %v1695 = vunpack.c.h.b16 %v1492
          %v1696 = vunpack.c.l.b16 %v1493
          %v1697 = vunpack.c.h.b16 %v1493
          %v1698 = vpack.c.b16 %v1572, %v1570
          %v1699 = vpack.c.b16 %v1573, %v1571
          %v1700 = vpack.c.b16 %v1576, %v1574
          %v1701 = vpack.c.b16 %v1577, %v1575
          %v1702 = vpack.c.b16 %v1580, %v1578
          %v1703 = vpack.c.b16 %v1581, %v1579
          %v1704 = vpack.c.b16 %v1584, %v1582
          %v1705 = vpack.c.b16 %v1585, %v1583
          %v1706 = vpack.c.b16 %v1588, %v1586
          %v1707 = vpack.c.b16 %v1589, %v1587
          %v1708 = vpack.c.b16 %v1592, %v1590
          %v1709 = vpack.c.b16 %v1593, %v1591
          %v1710 = vpack.c.b16 %v1596, %v1594
          %v1711 = vpack.c.b16 %v1597, %v1595
          %v1712 = vpack.c.b16 %v1600, %v1598
          %v1713 = vpack.c.b16 %v1601, %v1599
          %v1714 = vpack.c.b16 %v1604, %v1602
          %v1715 = vpack.c.b16 %v1605, %v1603
          %v1716 = vpack.c.b16 %v1608, %v1606
          %v1717 = vpack.c.b16 %v1609, %v1607
          %v1718 = vpack.c.b16 %v1612, %v1610
          %v1719 = vpack.c.b16 %v1613, %v1611
          %v1720 = vpack.c.b16 %v1616, %v1614
          %v1721 = vpack.c.b16 %v1617, %v1615
          %v1722 = vpack.c.b16 %v1620, %v1618
          %v1723 = vpack.c.b16 %v1621, %v1619
          %v1724 = vpack.c.b16 %v1624, %v1622
          %v1725 = vpack.c.b16 %v1625, %v1623
          %v1726 = vpack.c.b16 %v1628, %v1626
          %v1727 = vpack.c.b16 %v1629, %v1627
          %v1728 = vpack.c.b16 %v1632, %v1630
          %v1729 = vpack.c.b16 %v1633, %v1631
          %v1730 = vpack.c.b16 %v1636, %v1634
          %v1731 = vpack.c.b16 %v1637, %v1635
          %v1732 = vpack.c.b16 %v1640, %v1638
          %v1733 = vpack.c.b16 %v1641, %v1639
          %v1734 = vpack.c.b16 %v1644, %v1642
          %v1735 = vpack.c.b16 %v1645, %v1643
          %v1736 = vpack.c.b16 %v1648, %v1646
          %v1737 = vpack.c.b16 %v1649, %v1647
          %v1738 = vpack.c.b16 %v1652, %v1650
          %v1739 = vpack.c.b16 %v1653, %v1651
          %v1740 = vpack.c.b16 %v1656, %v1654
          %v1741 = vpack.c.b16 %v1657, %v1655
          %v1742 = vpack.c.b16 %v1660, %v1658
          %v1743 = vpack.c.b16 %v1661, %v1659
          %v1744 = vpack.c.b16 %v1664, %v1662
          %v1745 = vpack.c.b16 %v1665, %v1663
          %v1746 = vpack.c.b16 %v1668, %v1666
          %v1747 = vpack.c.b16 %v1669, %v1667
          %v1748 = vpack.c.b16 %v1672, %v1670
          %v1749 = vpack.c.b16 %v1673, %v1671
          %v1750 = vpack.c.b16 %v1676, %v1674
          %v1751 = vpack.c.b16 %v1677, %v1675
          %v1752 = vpack.c.b16 %v1680, %v1678
          %v1753 = vpack.c.b16 %v1681, %v1679
          %v1754 = vpack.c.b16 %v1684, %v1682
          %v1755 = vpack.c.b16 %v1685, %v1683
          %v1756 = vpack.c.b16 %v1688, %v1686
          %v1757 = vpack.c.b16 %v1689, %v1687
          %v1758 = vpack.c.b16 %v1692, %v1690
          %v1759 = vpack.c.b16 %v1693, %v1691
          %v1760 = vpack.c.b16 %v1696, %v1694
          %v1761 = vpack.c.b16 %v1697, %v1695
          %1826 = vmatprep.subr.bf16.mxu0 %v1699
          %1827 = vmatpush1.bf16.msra.mxu0 %v1698
          %1828 = vmatprep.subr.bf16.mxu0 %v1701
          %1829 = vmatpush1.bf16.msra.mxu0 %v1700
          %1830 = vmatprep.subr.bf16.mxu0 %v1703
          %1831 = vmatpush1.bf16.msra.mxu0 %v1702
          %1832 = vmatprep.subr.bf16.mxu0 %v1705
          %1833 = vmatpush1.bf16.msra.mxu0 %v1704
          %1834 = vmatprep.subr.bf16.mxu0 %v1707
          %1835 = vmatpush1.bf16.msra.mxu0 %v1706
          %1836 = vmatprep.subr.bf16.mxu0 %v1709
          %1837 = vmatpush1.bf16.msra.mxu0 %v1708
          %1838 = vmatprep.subr.bf16.mxu0 %v1711
          %1839 = vmatpush1.bf16.msra.mxu0 %v1710
          %1840 = vmatprep.subr.bf16.mxu0 %v1713
          %1841 = vmatpush1.bf16.msra.mxu0 %v1712
          %1842 = vmatprep.subr.bf16.mxu0 %v1715
          %1843 = vmatpush1.bf16.msra.mxu0 %v1714
          %1844 = vmatprep.subr.bf16.mxu0 %v1717
          %1845 = vmatpush1.bf16.msra.mxu0 %v1716
          %1846 = vmatprep.subr.bf16.mxu0 %v1719
          %1847 = vmatpush1.bf16.msra.mxu0 %v1718
          %1848 = vmatprep.subr.bf16.mxu0 %v1721
          %1849 = vmatpush1.bf16.msra.mxu0 %v1720
          %1850 = vmatprep.subr.bf16.mxu0 %v1723
          %1851 = vmatpush1.bf16.msra.mxu0 %v1722
          %1852 = vmatprep.subr.bf16.mxu0 %v1725
          %1853 = vmatpush1.bf16.msra.mxu0 %v1724
          %1854 = vmatprep.subr.bf16.mxu0 %v1727
          %1855 = vmatpush1.bf16.msra.mxu0 %v1726
          %1856 = vmatprep.subr.bf16.mxu0 %v1729
          %1857 = vmatpush1.bf16.msra.mxu0 %v1728
          %1858 = vmatprep.mubr.bf16.mxu0 %v1427
          %1859 = vmatmul.mubr.bf16.gmra.mrb[0].mxu0 %v1426
          %v1860 = vpop.f32.mrb[0].mxu0
          %v1861 = vadd.f32 %v1499, %v1860
          %v1862 = vpop.f32.mrb[0].mxu0
          %v1863 = vadd.f32 %v1503, %v1862
          %v1864 = vpop.f32.mrb[0].mxu0
          %v1865 = vpop.f32.mrb[0].mxu0
          %1866 = vdwg.mxu0
          %1867 = vmatprep.subr.bf16.mxu0 %v1731
          %1868 = vmatpush1.bf16.msra.mxu0 %v1730
          %1869 = vmatprep.subr.bf16.mxu0 %v1733
          %1870 = vmatpush1.bf16.msra.mxu0 %v1732
          %1871 = vmatprep.subr.bf16.mxu0 %v1735
          %1872 = vmatpush1.bf16.msra.mxu0 %v1734
          %1873 = vmatprep.subr.bf16.mxu0 %v1737
          %1874 = vmatpush1.bf16.msra.mxu0 %v1736
          %1875 = vmatprep.subr.bf16.mxu0 %v1739
          %1876 = vmatpush1.bf16.msra.mxu0 %v1738
          %1877 = vmatprep.subr.bf16.mxu0 %v1741
          %1878 = vmatpush1.bf16.msra.mxu0 %v1740
          %1879 = vmatprep.subr.bf16.mxu0 %v1743
          %1880 = vmatpush1.bf16.msra.mxu0 %v1742
          %1881 = vmatprep.subr.bf16.mxu0 %v1745
          %1882 = vmatpush1.bf16.msra.mxu0 %v1744
          %1883 = vmatprep.subr.bf16.mxu0 %v1747
          %1884 = vmatpush1.bf16.msra.mxu0 %v1746
          %1885 = vmatprep.subr.bf16.mxu0 %v1749
          %1886 = vmatpush1.bf16.msra.mxu0 %v1748
          %1887 = vmatprep.subr.bf16.mxu0 %v1751
          %1888 = vmatpush1.bf16.msra.mxu0 %v1750
          %1889 = vmatprep.subr.bf16.mxu0 %v1753
          %1890 = vmatpush1.bf16.msra.mxu0 %v1752
          %1891 = vmatprep.subr.bf16.mxu0 %v1755
          %1892 = vmatpush1.bf16.msra.mxu0 %v1754
          %1893 = vmatprep.subr.bf16.mxu0 %v1757
          %1894 = vmatpush1.bf16.msra.mxu0 %v1756
          %1895 = vmatprep.subr.bf16.mxu0 %v1759
          %1896 = vmatpush1.bf16.msra.mxu0 %v1758
          %1897 = vmatprep.subr.bf16.mxu0 %v1761
          %1898 = vmatpush1.bf16.msra.mxu0 %v1760
          %1899 = vmatprep.mubr.bf16.mxu0 %v1429
          %1900 = vmatmul.mubr.bf16.gmra.mrb[0].mxu0 %v1428
          %v1901 = vpop.f32.mrb[0].mxu0
          %v1902 = vadd.f32 %v1861, %v1901
          %v1903 = vpop.f32.mrb[0].mxu0
          %v1904 = vadd.f32 %v1863, %v1903
          %v1905 = vpop.f32.mrb[0].mxu0
          %v1906 = vpop.f32.mrb[0].mxu0
          %1907 = vdwg.mxu0
          %vm1908 = vcmp.gt.f32.partialorder %v1902, 0.0
          %vm1909 = vcmp.gt.f32.partialorder %v1904, 0.0
          %v1910 = vmul.f32 %v1902, 0.2
          %v1911 = vmul.f32 %v1904, 0.2
          %v1912 = vsel %vm1908, %v1902, %v1910
          %v1913 = vsel %vm1909, %v1904, %v1911
          %v1914 = vld [vmem:[%s5] sm:$0x3]
          %v1916 = vlaneseq
          %v1917 = vshrl.u32 %v1916, 7
          %v1918 = vsub.s32 0, %v1917
          %v1919 = vrot.slane %v1914, %v1918
          %v1920 = vlaneseq
          %v1921 = vshrl.u32 %v1920, 7
          %v1922 = vsub.s32 1, %v1921
          %v1923 = vrot.slane %v1914, %v1922
          %v1926 = vmul.f32 %v1912, %v1919
          %v1927 = vmul.f32 %v1913, %v1923
          %vm1928 = vcmask 1041408
          %v1929 = vsel %vm1928, %v1926, 0.0
          %v1930 = vsel %vm1928, %v1927, 0.0
          %v1931 = vadd.f32 %v1929, %v1930
          %1932 = vadd.xlane.f32.xlu0 %v1931
          %v1933 = vpop.xlane.xlu0 %1932
          %v1934 = vld [vmem:[#allocation3] sm:$0x1]
          %v1936 = vlaneseq
          %v1937 = vshrl.u32 %v1936, 7
          %v1938 = vsub.s32 0, %v1937
          %v1939 = vrot.slane %v1934, %v1938
          %v1941 = vadd.f32 %v1933, %v1939
          %v1942 = vxor.u32 %v1941, 2147483648
          %v1943 = vmul.f32 %v1942, 1.442695
          %v1944 = vpow.pop %v1943
          %v1945 = vadd.f32 %v1944, 1.0
          %v1946 = vrcp.pop %v1945
          %v1947 = vmul.f32 1.0, %v1946
          %vm1948 = vcmask 1024
          %1949 = vst.msk [vmem:[%s369] sm:$0x3] %vm1948, %v1947
        $region68: #{tpu_custom_call.1} parent=47 // pred_fallthru
          _
        %p1950 = scmp.lt.s32.totalorder %s30, 0
        %s1951 = scalar_select %p1950, %s30, 0
        %s1952 = smul.addr %s1951, 2
        %s1953 = scalar_lea.vmem %s7, %s1952
        // Predicated region
        $region69: #{tpu_custom_call.1} parent=47 // pred_check
          %p1954 = pneg %p215
        $region70: #{tpu_custom_call.1} parent=47 // pred_check_branch
          %1956 = sbr.rel (%p1954) target = $region72
        $region71: #{tpu_custom_call.1} parent=47 // pred_region
          _
        $region72: #{tpu_custom_call.1} parent=47 // pred_fallthru
          _
        // Predicated region
        $region73: #{tpu_custom_call.1} parent=47 // pred_check
          %p1957 = pneg %p215
        $region74: #{tpu_custom_call.1} parent=47 // pred_check_branch
          %1959 = sbr.rel (%p1957) target = $region76
        $region75: #{tpu_custom_call.1} parent=47 // pred_region
          %p1960 = scmp.lt.s32.totalorder %s30, 0
          %s1961 = scalar_select %p1960, %s30, 0
          %s1962 = smul.addr %s1961, 2
          %s1963 = scalar_lea.vmem %s7, %s1962
        $region76: #{tpu_custom_call.1} parent=47 // pred_fallthru
          _
      $region48: #{tpu_custom_call.1} parent=5 // pred_fallthru
        _
      %p1964 = scmp.le.s32.totalorder 2, %s21
      // Predicated region
      $region77: #{tpu_custom_call.1} parent=5 // pred_check
        %p1965 = pneg %p1964
      $region78: #{tpu_custom_call.1} parent=5 // pred_check_branch
        %1967 = sbr.rel (%p1965) target = $region80
      $region79: #{tpu_custom_call.1} parent=5 // pred_region
        %s1968 = ssub.s32 %s21, 2
      $region80: #{tpu_custom_call.1} parent=5 // pred_fallthru
        _
    $region6: #{tpu_custom_call.1} parent=1 // loop_footer
      %s25 = sadd.s32 1, %s21
    $region7: #{tpu_custom_call.1} parent=1 // loop_footer_branch
      %20 = sbr.rel target = $region3
    $region8: #{tpu_custom_call.1} parent=1 // loop_exit
      _
    %1969 = vsyncpa [#allocation5], 1
    %s1970 = scalar_lea.sflag [#allocation5], 1
    %1971 = vsyncpa %s1970, 1
    %1972 = vsyncpa [#allocation7], 1
    %s1973 = scalar_lea.sflag [#allocation7], 1
    %1974 = vsyncpa %s1973, 1

</llo_original>
